<compile_context>
chip_gen: v7x
topology: tpu7x:2x2x1
jax: 0.10.0
libtpu: 0.0.40
codegen_flags: <defaults>
</compile_context>

<pallas_src>
import functools

import jax
import jax.numpy as jnp
import numpy as np
from jax.experimental import pallas as pl
from jax.experimental.pallas import tpu as pltpu


# -----------------------------------------------------------------------------
# Exact matmul helper: x @ b with f32-accurate results irrespective of the MXU's
# default (bf16) matmul precision.  The taps in `b` are exact in bf16, so splitting
# the f32 data into three bf16-exact slices makes every pass exact; bf16 data goes
# through in a single pass.
# -----------------------------------------------------------------------------
def _exact_dot(x, b):
    dn = (((1,), (0,)), ((), ()))
    if x.dtype != jnp.float32:
        return jax.lax.dot_general(x, b.astype(x.dtype), dn,
                                   preferred_element_type=jnp.float32)
    hi = x.astype(jnp.bfloat16).astype(jnp.float32)
    rem = x - hi
    mid = rem.astype(jnp.bfloat16).astype(jnp.float32)
    lo = rem - mid
    acc = jax.lax.dot_general(hi, b, dn, preferred_element_type=jnp.float32)
    acc = acc + jax.lax.dot_general(mid, b, dn, preferred_element_type=jnp.float32)
    acc = acc + jax.lax.dot_general(lo, b, dn, preferred_element_type=jnp.float32)
    return acc


# -----------------------------------------------------------------------------
# Pallas kernel: one block of `cb` channels, whole spatial plane.
#   x_ref: (cb, H, W)          raw (un-padded) input plane(s), NCHW layout
#   b_ref: (cc+2, 2*cc)        W-direction blend+interleave matrix (constant)
#   o_ref: (cb, H, 4*W)        lanes [0,2W) = output rows 2h, [2W,4W) = rows 2h+1
# -----------------------------------------------------------------------------
def _upsample2x_kernel(x_ref, b_ref, o_ref, *, w_lo, w_hi, cc, pad_type):
    cb, H, W = x_ref.shape
    two_w = 2 * W
    n_chunks = W // cc
    b = b_ref[...]

    for c in range(cb):
        x = x_ref[c]                                           # (H, W)

        # Fold the 1-pixel column padding into the tile (no wrapper jnp.pad).
        if pad_type in ("repl", "replicate"):
            left, right = x[:, :1], x[:, W - 1:]
        elif pad_type in ("refl", "reflect"):
            left, right = x[:, 1:2], x[:, W - 2:W - 1]
        else:  # 'zero'
            left = jnp.zeros_like(x[:, :1])
            right = left
        xp = jnp.concatenate([left, x, right], axis=1)         # (H, W+2)

        for j in range(n_chunks):
            xc = xp[:, j * cc: j * cc + cc + 2]                # (H, cc+2)

            # W-direction: blend + even/odd column interleave in one MXU pass.
            y = _exact_dot(xc, b)                              # (H, 2*cc) f32

            # H-direction neighbours; the edge row already encodes the padding.
            # (1-row shifted copies are used instead of pltpu.roll purely so the
            # shift direction is unambiguous; they live on the small 2x-input
            # intermediate stream and are hidden under the 4x output DMA.)
            if pad_type in ("repl", "replicate"):
                top_edge, bot_edge = y[:1], y[H - 1:]
            elif pad_type in ("refl", "reflect"):
                top_edge, bot_edge = y[1:2], y[H - 2:H - 1]
            else:  # 'zero': upsampled zero row is zero (the op is linear)
                top_edge = jnp.zeros_like(y[:1])
                bot_edge = top_edge
            y_prev = jnp.concatenate([top_edge, y[:H - 1]], axis=0)   # padded y[m-1]
            y_next = jnp.concatenate([y[1:], bot_edge], axis=0)       # padded y[m+1]

            even = w_lo * y_prev + w_hi * y                    # output rows 2m
            odd = w_hi * y + w_lo * y_next                     # output rows 2m+1

            lo_w, hi_w = j * 2 * cc, (j + 1) * 2 * cc
            o_ref[c, :, lo_w:hi_w] = even.astype(o_ref.dtype)
            o_ref[c, :, two_w + lo_w: two_w + hi_w] = odd.astype(o_ref.dtype)


# -----------------------------------------------------------------------------
# Public forward: matches Upsample(channels, pad_type='repl', filt_size=4, stride=2)
# Input/output are NCHW like the PyTorch module.
# -----------------------------------------------------------------------------
def upsample_forward(x_nchw, *, filt_size=4, stride=2, pad_type="repl"):
    if filt_size != 4 or stride != 2:
        # TODO(synk): only the module defaults are lowered; other filter sizes need
        # a different tap schedule.
        raise NotImplementedError("Pallas Upsample kernel supports filt_size=4, stride=2")
    if pad_type not in ("repl", "replicate", "refl", "reflect", "zero"):
        raise ValueError(f"Pad type [{pad_type}] not recognized")

    N, C, H, W = x_nchw.shape
    itemsize = x_nchw.dtype.itemsize

    # Separable 1-D taps of the transposed-conv blur: [1,3,3,1]/8 * stride = [.25,.75,...].
    a = np.array([1.0, 3.0, 3.0, 1.0])
    w1d = a / a.sum() * stride
    w_lo, w_hi = float(w1d[0]), float(w1d[1])

    # Column-chunk size: largest divisor of W <= 128 (keeps the per-chunk MXU K dim
    # small; for W % 64 == 0 each output chunk is exactly one 128-lane vreg wide).
    cc = max(d for d in range(1, min(W, 128) + 1) if W % d == 0)
    if cc < 8:                      # awkward (e.g. prime) widths: one chunk per row
        cc = W

    # B: (cc+2, 2*cc) -- maps cc+2 padded input columns to 2*cc interleaved upsampled
    # output columns (W blend + interleave fused).  Entries are exact in bf16.
    B = np.zeros((cc + 2, 2 * cc), np.float32)
    for d in range(2 * cc):
        k = d // 2
        if d % 2 == 0:
            B[k, d] = w_lo
            B[k + 1, d] = w_hi
        else:
            B[k + 1, d] = w_hi
            B[k + 2, d] = w_lo
    B = jnp.asarray(B)

    # Channel-block size: aim for ~>=1 MiB of output per grid step (per-step overhead
    # ~0.35us) while keeping double-buffered in+out blocks modest.
    per_ch_io = 5 * H * W * itemsize                      # 1x in + 4x out per channel
    cb = 1
    for d in range(1, min(C, 8) + 1):
        if C % d:
            continue
        if 2 * d * per_ch_io > (24 << 20):
            break
        cb = d
        if d * 4 * H * W * itemsize >= (1 << 20):
            break
    nc = N * C
    grid = (nc // cb,)

    # VMEM budget from the real per-step footprint (double-buffered blocks + constant
    # matrix + f32 temporaries of one channel/chunk iteration), capped for v7x.
    in_blk = cb * H * W * itemsize
    out_blk = cb * 4 * H * W * itemsize
    b_blk = int(B.size) * 4
    tmp = 4 * (H * (W + 2) + 12 * H * 2 * cc)
    vmem_bytes = int(min(56 << 20,
                         max(16 << 20, 2 * (in_blk + out_blk) + 2 * b_blk + tmp + (2 << 20))))

    kernel = functools.partial(_upsample2x_kernel, w_lo=w_lo, w_hi=w_hi, cc=cc,
                               pad_type=pad_type)

    x_flat = x_nchw.reshape(nc, H, W)                     # free: merge N and C
    out = pl.pallas_call(
        kernel,
        out_shape=jax.ShapeDtypeStruct((nc, H, 4 * W), x_nchw.dtype),
        grid=grid,
        in_specs=[
            pl.BlockSpec((cb, H, W), lambda i: (i, 0, 0)),
            pl.BlockSpec((cc + 2, 2 * cc), lambda i: (0, 0)),   # resident, fetched once
        ],
        out_specs=pl.BlockSpec((cb, H, 4 * W), lambda i: (i, 0, 0)),
        compiler_params=pltpu.CompilerParams(
            dimension_semantics=("parallel",),
            vmem_limit_bytes=vmem_bytes,
        ),
    )(x_flat, B)

    # Free row-major reinterpretation (no transpose anywhere): within each output
    # row h, lanes [0,2W) are out-row 2h and lanes [2W,4W) are out-row 2h+1, so
    # (nc, H, 4W) -> (N, C, 2H, 2W) is a pure reshape.
    return out.reshape(N, C, 2 * H, 2 * W)


# -----------------------------------------------------------------------------
# Pure-JAX reference: literal transcription of the PyTorch forward (replication
# pad -> grouped conv_transpose2d -> crop) via the transposed-conv equivalence.
# -----------------------------------------------------------------------------
def ref_upsample(x_nchw, *, filt_size=4, stride=2, pad_type="repl"):
    N, C, H, W = x_nchw.shape
    taps = {1: [1.0], 2: [1.0, 1.0], 3: [1.0, 2.0, 1.0], 4: [1.0, 3.0, 3.0, 1.0],
            5: [1.0, 4.0, 6.0, 4.0, 1.0], 6: [1.0, 5.0, 10.0, 10.0, 5.0, 1.0],
            7: [1.0, 6.0, 15.0, 20.0, 15.0, 6.0, 1.0]}[filt_size]
    a = np.asarray(taps)
    filt = np.outer(a, a)
    filt = filt / filt.sum() * (stride ** 2)
    w = jnp.asarray(np.tile(filt[None, None], (C, 1, 1, 1)), x_nchw.dtype)  # (C,1,k,k)

    pad_size = (filt_size - 1) // 2
    pad_mode = "edge" if pad_type in ("repl", "replicate") else "constant"
    xp = jnp.pad(x_nchw, ((0, 0), (0, 0), (1, 1), (1, 1)), mode=pad_mode)

    # conv_transpose2d(stride=s, padding=p) == conv(lhs_dilation=s,
    #                                              padding=k-1-p, flipped kernel)
    p = 1 + pad_size
    edge = filt_size - 1 - p
    y = jax.lax.conv_general_dilated(
        xp, w[:, :, ::-1, ::-1],
        window_strides=(1, 1),
        padding=((edge, edge), (edge, edge)),
        lhs_dilation=(stride, stride),
        dimension_numbers=("NCHW", "OIHW", "NCHW"),
        feature_group_count=C,
        precision=jax.lax.Precision.HIGHEST,
    )
    y = y[:, :, 1:, 1:]
    if filt_size % 2 == 1:
        return y
    return y[:, :, :-1, :-1]


if __name__ == "__main__":
    key = jax.random.PRNGKey(0)
    N, C, H, W = 2, 4, 16, 16
    x = jax.random.normal(key, (N, C, H, W), jnp.float32)   # NCHW, like PyTorch

    out = jax.block_until_ready(upsample_forward(x))
    ref = jax.block_until_ready(ref_upsample(x))

    assert out.shape == (N, C, 2 * H, 2 * W), out.shape
    np.testing.assert_allclose(np.asarray(out), np.asarray(ref), rtol=1e-5, atol=1e-5)

    print("KERNEL_OK")
</pallas_src>

<mosaic_0001>
module attributes {stable_mosaic.version = 11 : i64} {
  func.func @_upsample2x_kernel(%arg0: i32, %arg1: memref<4x16x16xf32, #tpu.memory_space<vmem>>, %arg2: memref<18x32xf32, #tpu.memory_space<vmem>>, %arg3: memref<4x16x64xf32, #tpu.memory_space<vmem>>) attributes {dimension_semantics = [#tpu.dimension_semantics<parallel>], iteration_bounds = array<i64: 2>, scalar_prefetch = 0 : i64, scratch_operands = 0 : i64, tpu.core_type = #tpu.core_type<tc>, window_params = [{transform_indices = @transform_0, window_bounds = array<i64: 4, 16, 16>}, {pipeline_mode = #tpu.pipeline_mode<synchronous>, transform_indices = @transform_1, window_bounds = array<i64: 18, 32>}, {transform_indices = @transform_2, window_bounds = array<i64: 4, 16, 64>}]} {
    %c0 = arith.constant 0 : index
    %c0_0 = arith.constant 0 : index
    %0 = vector.load %arg2[%c0, %c0_0] : memref<18x32xf32, #tpu.memory_space<vmem>>, vector<18x32xf32>
    %c0_1 = arith.constant 0 : index
    %c0_2 = arith.constant 0 : index
    %c0_3 = arith.constant 0 : index
    %1 = vector.load %arg1[%c0_1, %c0_2, %c0_3] : memref<4x16x16xf32, #tpu.memory_space<vmem>>, vector<1x16x16xf32>
    %2 = vector.shape_cast %1 : vector<1x16x16xf32> to vector<16x16xf32>
    %3 = vector.extract_strided_slice %2 {offsets = [0, 0], sizes = [16, 1], strides = [1, 1]} : vector<16x16xf32> to vector<16x1xf32>
    %4 = vector.extract_strided_slice %2 {offsets = [0, 15], sizes = [16, 1], strides = [1, 1]} : vector<16x16xf32> to vector<16x1xf32>
    %5 = tpu.concatenate %3, %2, %4 in 1 : vector<16x1xf32>, vector<16x16xf32>, vector<16x1xf32> -> vector<16x18xf32>
    %6 = arith.truncf %5 : vector<16x18xf32> to vector<16x18xbf16>
    %7 = arith.extf %6 : vector<16x18xbf16> to vector<16x18xf32>
    %8 = arith.subf %5, %7 : vector<16x18xf32>
    %9 = arith.truncf %8 : vector<16x18xf32> to vector<16x18xbf16>
    %10 = arith.extf %9 : vector<16x18xbf16> to vector<16x18xf32>
    %11 = arith.subf %8, %10 : vector<16x18xf32>
    %cst = arith.constant dense<0.000000e+00> : vector<16x32xf32>
    %12 = tpu.matmul %7, %0, %cst {dimension_numbers = #tpu.dot_dimension_numbers<[1], [0], [0], [1], [0, 0, 1, 1], [], []>} : vector<16x18xf32>, vector<18x32xf32>, vector<16x32xf32> -> vector<16x32xf32>
    %cst_4 = arith.constant dense<0.000000e+00> : vector<16x32xf32>
    %13 = tpu.matmul %10, %0, %cst_4 {dimension_numbers = #tpu.dot_dimension_numbers<[1], [0], [0], [1], [0, 0, 1, 1], [], []>} : vector<16x18xf32>, vector<18x32xf32>, vector<16x32xf32> -> vector<16x32xf32>
    %14 = arith.addf %12, %13 : vector<16x32xf32>
    %cst_5 = arith.constant dense<0.000000e+00> : vector<16x32xf32>
    %15 = tpu.matmul %11, %0, %cst_5 {dimension_numbers = #tpu.dot_dimension_numbers<[1], [0], [0], [1], [0, 0, 1, 1], [], []>} : vector<16x18xf32>, vector<18x32xf32>, vector<16x32xf32> -> vector<16x32xf32>
    %16 = arith.addf %14, %15 : vector<16x32xf32>
    %17 = vector.extract_strided_slice %16 {offsets = [0, 0], sizes = [1, 32], strides = [1, 1]} : vector<16x32xf32> to vector<1x32xf32>
    %18 = vector.extract_strided_slice %16 {offsets = [15, 0], sizes = [1, 32], strides = [1, 1]} : vector<16x32xf32> to vector<1x32xf32>
    %19 = vector.extract_strided_slice %16 {offsets = [0, 0], sizes = [15, 32], strides = [1, 1]} : vector<16x32xf32> to vector<15x32xf32>
    %20 = tpu.concatenate %17, %19 in 0 : vector<1x32xf32>, vector<15x32xf32> -> vector<16x32xf32>
    %21 = vector.extract_strided_slice %16 {offsets = [1, 0], sizes = [15, 32], strides = [1, 1]} : vector<16x32xf32> to vector<15x32xf32>
    %22 = tpu.concatenate %21, %18 in 0 : vector<15x32xf32>, vector<1x32xf32> -> vector<16x32xf32>
    %cst_6 = arith.constant 2.500000e-01 : f32
    %23 = vector.broadcast %cst_6 : f32 to vector<16x32xf32>
    %24 = arith.mulf %23, %20 : vector<16x32xf32>
    %cst_7 = arith.constant 7.500000e-01 : f32
    %25 = vector.broadcast %cst_7 : f32 to vector<16x32xf32>
    %26 = arith.mulf %25, %16 : vector<16x32xf32>
    %27 = arith.addf %24, %26 : vector<16x32xf32>
    %cst_8 = arith.constant 7.500000e-01 : f32
    %28 = vector.broadcast %cst_8 : f32 to vector<16x32xf32>
    %29 = arith.mulf %28, %16 : vector<16x32xf32>
    %cst_9 = arith.constant 2.500000e-01 : f32
    %30 = vector.broadcast %cst_9 : f32 to vector<16x32xf32>
    %31 = arith.mulf %30, %22 : vector<16x32xf32>
    %32 = arith.addf %29, %31 : vector<16x32xf32>
    %c0_10 = arith.constant 0 : index
    %c0_11 = arith.constant 0 : index
    %c0_12 = arith.constant 0 : index
    %33 = vector.load %arg3[%c0_10, %c0_11, %c0_12] : memref<4x16x64xf32, #tpu.memory_space<vmem>>, vector<1x16x32xf32>
    %34 = vector.shape_cast %33 : vector<1x16x32xf32> to vector<16x32xf32>
    %35 = vector.shape_cast %27 : vector<16x32xf32> to vector<1x16x32xf32>
    tpu.vector_store %arg3[%c0_10, %c0_11, %c0_12], %35 {strides = array<i32>} : memref<4x16x64xf32, #tpu.memory_space<vmem>>, vector<1x16x32xf32>,
    %c0_13 = arith.constant 0 : index
    %c0_14 = arith.constant 0 : index
    %c32 = arith.constant 32 : index
    %36 = vector.load %arg3[%c0_13, %c0_14, %c32] : memref<4x16x64xf32, #tpu.memory_space<vmem>>, vector<1x16x32xf32>
    %37 = vector.shape_cast %36 : vector<1x16x32xf32> to vector<16x32xf32>
    %38 = vector.shape_cast %32 : vector<16x32xf32> to vector<1x16x32xf32>
    tpu.vector_store %arg3[%c0_13, %c0_14, %c32], %38 {strides = array<i32>} : memref<4x16x64xf32, #tpu.memory_space<vmem>>, vector<1x16x32xf32>,
    %c1 = arith.constant 1 : index
    %c0_15 = arith.constant 0 : index
    %c0_16 = arith.constant 0 : index
    %39 = vector.load %arg1[%c1, %c0_15, %c0_16] : memref<4x16x16xf32, #tpu.memory_space<vmem>>, vector<1x16x16xf32>
    %40 = vector.shape_cast %39 : vector<1x16x16xf32> to vector<16x16xf32>
    %41 = vector.extract_strided_slice %40 {offsets = [0, 0], sizes = [16, 1], strides = [1, 1]} : vector<16x16xf32> to vector<16x1xf32>
    %42 = vector.extract_strided_slice %40 {offsets = [0, 15], sizes = [16, 1], strides = [1, 1]} : vector<16x16xf32> to vector<16x1xf32>
    %43 = tpu.concatenate %41, %40, %42 in 1 : vector<16x1xf32>, vector<16x16xf32>, vector<16x1xf32> -> vector<16x18xf32>
    %44 = arith.truncf %43 : vector<16x18xf32> to vector<16x18xbf16>
    %45 = arith.extf %44 : vector<16x18xbf16> to vector<16x18xf32>
    %46 = arith.subf %43, %45 : vector<16x18xf32>
    %47 = arith.truncf %46 : vector<16x18xf32> to vector<16x18xbf16>
    %48 = arith.extf %47 : vector<16x18xbf16> to vector<16x18xf32>
    %49 = arith.subf %46, %48 : vector<16x18xf32>
    %cst_17 = arith.constant dense<0.000000e+00> : vector<16x32xf32>
    %50 = tpu.matmul %45, %0, %cst_17 {dimension_numbers = #tpu.dot_dimension_numbers<[1], [0], [0], [1], [0, 0, 1, 1], [], []>} : vector<16x18xf32>, vector<18x32xf32>, vector<16x32xf32> -> vector<16x32xf32>
    %cst_18 = arith.constant dense<0.000000e+00> : vector<16x32xf32>
    %51 = tpu.matmul %48, %0, %cst_18 {dimension_numbers = #tpu.dot_dimension_numbers<[1], [0], [0], [1], [0, 0, 1, 1], [], []>} : vector<16x18xf32>, vector<18x32xf32>, vector<16x32xf32> -> vector<16x32xf32>
    %52 = arith.addf %50, %51 : vector<16x32xf32>
    %cst_19 = arith.constant dense<0.000000e+00> : vector<16x32xf32>
    %53 = tpu.matmul %49, %0, %cst_19 {dimension_numbers = #tpu.dot_dimension_numbers<[1], [0], [0], [1], [0, 0, 1, 1], [], []>} : vector<16x18xf32>, vector<18x32xf32>, vector<16x32xf32> -> vector<16x32xf32>
    %54 = arith.addf %52, %53 : vector<16x32xf32>
    %55 = vector.extract_strided_slice %54 {offsets = [0, 0], sizes = [1, 32], strides = [1, 1]} : vector<16x32xf32> to vector<1x32xf32>
    %56 = vector.extract_strided_slice %54 {offsets = [15, 0], sizes = [1, 32], strides = [1, 1]} : vector<16x32xf32> to vector<1x32xf32>
    %57 = vector.extract_strided_slice %54 {offsets = [0, 0], sizes = [15, 32], strides = [1, 1]} : vector<16x32xf32> to vector<15x32xf32>
    %58 = tpu.concatenate %55, %57 in 0 : vector<1x32xf32>, vector<15x32xf32> -> vector<16x32xf32>
    %59 = vector.extract_strided_slice %54 {offsets = [1, 0], sizes = [15, 32], strides = [1, 1]} : vector<16x32xf32> to vector<15x32xf32>
    %60 = tpu.concatenate %59, %56 in 0 : vector<15x32xf32>, vector<1x32xf32> -> vector<16x32xf32>
    %cst_20 = arith.constant 2.500000e-01 : f32
    %61 = vector.broadcast %cst_20 : f32 to vector<16x32xf32>
    %62 = arith.mulf %61, %58 : vector<16x32xf32>
    %cst_21 = arith.constant 7.500000e-01 : f32
    %63 = vector.broadcast %cst_21 : f32 to vector<16x32xf32>
    %64 = arith.mulf %63, %54 : vector<16x32xf32>
    %65 = arith.addf %62, %64 : vector<16x32xf32>
    %cst_22 = arith.constant 7.500000e-01 : f32
    %66 = vector.broadcast %cst_22 : f32 to vector<16x32xf32>
    %67 = arith.mulf %66, %54 : vector<16x32xf32>
    %cst_23 = arith.constant 2.500000e-01 : f32
    %68 = vector.broadcast %cst_23 : f32 to vector<16x32xf32>
    %69 = arith.mulf %68, %60 : vector<16x32xf32>
    %70 = arith.addf %67, %69 : vector<16x32xf32>
    %c1_24 = arith.constant 1 : index
    %c0_25 = arith.constant 0 : index
    %c0_26 = arith.constant 0 : index
    %71 = vector.load %arg3[%c1_24, %c0_25, %c0_26] : memref<4x16x64xf32, #tpu.memory_space<vmem>>, vector<1x16x32xf32>
    %72 = vector.shape_cast %71 : vector<1x16x32xf32> to vector<16x32xf32>
    %73 = vector.shape_cast %65 : vector<16x32xf32> to vector<1x16x32xf32>
    tpu.vector_store %arg3[%c1_24, %c0_25, %c0_26], %73 {strides = array<i32>} : memref<4x16x64xf32, #tpu.memory_space<vmem>>, vector<1x16x32xf32>,
    %c1_27 = arith.constant 1 : index
    %c0_28 = arith.constant 0 : index
    %c32_29 = arith.constant 32 : index
    %74 = vector.load %arg3[%c1_27, %c0_28, %c32_29] : memref<4x16x64xf32, #tpu.memory_space<vmem>>, vector<1x16x32xf32>
    %75 = vector.shape_cast %74 : vector<1x16x32xf32> to vector<16x32xf32>
    %76 = vector.shape_cast %70 : vector<16x32xf32> to vector<1x16x32xf32>
    tpu.vector_store %arg3[%c1_27, %c0_28, %c32_29], %76 {strides = array<i32>} : memref<4x16x64xf32, #tpu.memory_space<vmem>>, vector<1x16x32xf32>,
    %c2 = arith.constant 2 : index
    %c0_30 = arith.constant 0 : index
    %c0_31 = arith.constant 0 : index
    %77 = vector.load %arg1[%c2, %c0_30, %c0_31] : memref<4x16x16xf32, #tpu.memory_space<vmem>>, vector<1x16x16xf32>
    %78 = vector.shape_cast %77 : vector<1x16x16xf32> to vector<16x16xf32>
    %79 = vector.extract_strided_slice %78 {offsets = [0, 0], sizes = [16, 1], strides = [1, 1]} : vector<16x16xf32> to vector<16x1xf32>
    %80 = vector.extract_strided_slice %78 {offsets = [0, 15], sizes = [16, 1], strides = [1, 1]} : vector<16x16xf32> to vector<16x1xf32>
    %81 = tpu.concatenate %79, %78, %80 in 1 : vector<16x1xf32>, vector<16x16xf32>, vector<16x1xf32> -> vector<16x18xf32>
    %82 = arith.truncf %81 : vector<16x18xf32> to vector<16x18xbf16>
    %83 = arith.extf %82 : vector<16x18xbf16> to vector<16x18xf32>
    %84 = arith.subf %81, %83 : vector<16x18xf32>
    %85 = arith.truncf %84 : vector<16x18xf32> to vector<16x18xbf16>
    %86 = arith.extf %85 : vector<16x18xbf16> to vector<16x18xf32>
    %87 = arith.subf %84, %86 : vector<16x18xf32>
    %cst_32 = arith.constant dense<0.000000e+00> : vector<16x32xf32>
    %88 = tpu.matmul %83, %0, %cst_32 {dimension_numbers = #tpu.dot_dimension_numbers<[1], [0], [0], [1], [0, 0, 1, 1], [], []>} : vector<16x18xf32>, vector<18x32xf32>, vector<16x32xf32> -> vector<16x32xf32>
    %cst_33 = arith.constant dense<0.000000e+00> : vector<16x32xf32>
    %89 = tpu.matmul %86, %0, %cst_33 {dimension_numbers = #tpu.dot_dimension_numbers<[1], [0], [0], [1], [0, 0, 1, 1], [], []>} : vector<16x18xf32>, vector<18x32xf32>, vector<16x32xf32> -> vector<16x32xf32>
    %90 = arith.addf %88, %89 : vector<16x32xf32>
    %cst_34 = arith.constant dense<0.000000e+00> : vector<16x32xf32>
    %91 = tpu.matmul %87, %0, %cst_34 {dimension_numbers = #tpu.dot_dimension_numbers<[1], [0], [0], [1], [0, 0, 1, 1], [], []>} : vector<16x18xf32>, vector<18x32xf32>, vector<16x32xf32> -> vector<16x32xf32>
    %92 = arith.addf %90, %91 : vector<16x32xf32>
    %93 = vector.extract_strided_slice %92 {offsets = [0, 0], sizes = [1, 32], strides = [1, 1]} : vector<16x32xf32> to vector<1x32xf32>
    %94 = vector.extract_strided_slice %92 {offsets = [15, 0], sizes = [1, 32], strides = [1, 1]} : vector<16x32xf32> to vector<1x32xf32>
    %95 = vector.extract_strided_slice %92 {offsets = [0, 0], sizes = [15, 32], strides = [1, 1]} : vector<16x32xf32> to vector<15x32xf32>
    %96 = tpu.concatenate %93, %95 in 0 : vector<1x32xf32>, vector<15x32xf32> -> vector<16x32xf32>
    %97 = vector.extract_strided_slice %92 {offsets = [1, 0], sizes = [15, 32], strides = [1, 1]} : vector<16x32xf32> to vector<15x32xf32>
    %98 = tpu.concatenate %97, %94 in 0 : vector<15x32xf32>, vector<1x32xf32> -> vector<16x32xf32>
    %cst_35 = arith.constant 2.500000e-01 : f32
    %99 = vector.broadcast %cst_35 : f32 to vector<16x32xf32>
    %100 = arith.mulf %99, %96 : vector<16x32xf32>
    %cst_36 = arith.constant 7.500000e-01 : f32
    %101 = vector.broadcast %cst_36 : f32 to vector<16x32xf32>
    %102 = arith.mulf %101, %92 : vector<16x32xf32>
    %103 = arith.addf %100, %102 : vector<16x32xf32>
    %cst_37 = arith.constant 7.500000e-01 : f32
    %104 = vector.broadcast %cst_37 : f32 to vector<16x32xf32>
    %105 = arith.mulf %104, %92 : vector<16x32xf32>
    %cst_38 = arith.constant 2.500000e-01 : f32
    %106 = vector.broadcast %cst_38 : f32 to vector<16x32xf32>
    %107 = arith.mulf %106, %98 : vector<16x32xf32>
    %108 = arith.addf %105, %107 : vector<16x32xf32>
    %c2_39 = arith.constant 2 : index
    %c0_40 = arith.constant 0 : index
    %c0_41 = arith.constant 0 : index
    %109 = vector.load %arg3[%c2_39, %c0_40, %c0_41] : memref<4x16x64xf32, #tpu.memory_space<vmem>>, vector<1x16x32xf32>
    %110 = vector.shape_cast %109 : vector<1x16x32xf32> to vector<16x32xf32>
    %111 = vector.shape_cast %103 : vector<16x32xf32> to vector<1x16x32xf32>
    tpu.vector_store %arg3[%c2_39, %c0_40, %c0_41], %111 {strides = array<i32>} : memref<4x16x64xf32, #tpu.memory_space<vmem>>, vector<1x16x32xf32>,
    %c2_42 = arith.constant 2 : index
    %c0_43 = arith.constant 0 : index
    %c32_44 = arith.constant 32 : index
    %112 = vector.load %arg3[%c2_42, %c0_43, %c32_44] : memref<4x16x64xf32, #tpu.memory_space<vmem>>, vector<1x16x32xf32>
    %113 = vector.shape_cast %112 : vector<1x16x32xf32> to vector<16x32xf32>
    %114 = vector.shape_cast %108 : vector<16x32xf32> to vector<1x16x32xf32>
    tpu.vector_store %arg3[%c2_42, %c0_43, %c32_44], %114 {strides = array<i32>} : memref<4x16x64xf32, #tpu.memory_space<vmem>>, vector<1x16x32xf32>,
    %c3 = arith.constant 3 : index
    %c0_45 = arith.constant 0 : index
    %c0_46 = arith.constant 0 : index
    %115 = vector.load %arg1[%c3, %c0_45, %c0_46] : memref<4x16x16xf32, #tpu.memory_space<vmem>>, vector<1x16x16xf32>
    %116 = vector.shape_cast %115 : vector<1x16x16xf32> to vector<16x16xf32>
    %117 = vector.extract_strided_slice %116 {offsets = [0, 0], sizes = [16, 1], strides = [1, 1]} : vector<16x16xf32> to vector<16x1xf32>
    %118 = vector.extract_strided_slice %116 {offsets = [0, 15], sizes = [16, 1], strides = [1, 1]} : vector<16x16xf32> to vector<16x1xf32>
    %119 = tpu.concatenate %117, %116, %118 in 1 : vector<16x1xf32>, vector<16x16xf32>, vector<16x1xf32> -> vector<16x18xf32>
    %120 = arith.truncf %119 : vector<16x18xf32> to vector<16x18xbf16>
    %121 = arith.extf %120 : vector<16x18xbf16> to vector<16x18xf32>
    %122 = arith.subf %119, %121 : vector<16x18xf32>
    %123 = arith.truncf %122 : vector<16x18xf32> to vector<16x18xbf16>
    %124 = arith.extf %123 : vector<16x18xbf16> to vector<16x18xf32>
    %125 = arith.subf %122, %124 : vector<16x18xf32>
    %cst_47 = arith.constant dense<0.000000e+00> : vector<16x32xf32>
    %126 = tpu.matmul %121, %0, %cst_47 {dimension_numbers = #tpu.dot_dimension_numbers<[1], [0], [0], [1], [0, 0, 1, 1], [], []>} : vector<16x18xf32>, vector<18x32xf32>, vector<16x32xf32> -> vector<16x32xf32>
    %cst_48 = arith.constant dense<0.000000e+00> : vector<16x32xf32>
    %127 = tpu.matmul %124, %0, %cst_48 {dimension_numbers = #tpu.dot_dimension_numbers<[1], [0], [0], [1], [0, 0, 1, 1], [], []>} : vector<16x18xf32>, vector<18x32xf32>, vector<16x32xf32> -> vector<16x32xf32>
    %128 = arith.addf %126, %127 : vector<16x32xf32>
    %cst_49 = arith.constant dense<0.000000e+00> : vector<16x32xf32>
    %129 = tpu.matmul %125, %0, %cst_49 {dimension_numbers = #tpu.dot_dimension_numbers<[1], [0], [0], [1], [0, 0, 1, 1], [], []>} : vector<16x18xf32>, vector<18x32xf32>, vector<16x32xf32> -> vector<16x32xf32>
    %130 = arith.addf %128, %129 : vector<16x32xf32>
    %131 = vector.extract_strided_slice %130 {offsets = [0, 0], sizes = [1, 32], strides = [1, 1]} : vector<16x32xf32> to vector<1x32xf32>
    %132 = vector.extract_strided_slice %130 {offsets = [15, 0], sizes = [1, 32], strides = [1, 1]} : vector<16x32xf32> to vector<1x32xf32>
    %133 = vector.extract_strided_slice %130 {offsets = [0, 0], sizes = [15, 32], strides = [1, 1]} : vector<16x32xf32> to vector<15x32xf32>
    %134 = tpu.concatenate %131, %133 in 0 : vector<1x32xf32>, vector<15x32xf32> -> vector<16x32xf32>
    %135 = vector.extract_strided_slice %130 {offsets = [1, 0], sizes = [15, 32], strides = [1, 1]} : vector<16x32xf32> to vector<15x32xf32>
    %136 = tpu.concatenate %135, %132 in 0 : vector<15x32xf32>, vector<1x32xf32> -> vector<16x32xf32>
    %cst_50 = arith.constant 2.500000e-01 : f32
    %137 = vector.broadcast %cst_50 : f32 to vector<16x32xf32>
    %138 = arith.mulf %137, %134 : vector<16x32xf32>
    %cst_51 = arith.constant 7.500000e-01 : f32
    %139 = vector.broadcast %cst_51 : f32 to vector<16x32xf32>
    %140 = arith.mulf %139, %130 : vector<16x32xf32>
    %141 = arith.addf %138, %140 : vector<16x32xf32>
    %cst_52 = arith.constant 7.500000e-01 : f32
    %142 = vector.broadcast %cst_52 : f32 to vector<16x32xf32>
    %143 = arith.mulf %142, %130 : vector<16x32xf32>
    %cst_53 = arith.constant 2.500000e-01 : f32
    %144 = vector.broadcast %cst_53 : f32 to vector<16x32xf32>
    %145 = arith.mulf %144, %136 : vector<16x32xf32>
    %146 = arith.addf %143, %145 : vector<16x32xf32>
    %c3_54 = arith.constant 3 : index
    %c0_55 = arith.constant 0 : index
    %c0_56 = arith.constant 0 : index
    %147 = vector.load %arg3[%c3_54, %c0_55, %c0_56] : memref<4x16x64xf32, #tpu.memory_space<vmem>>, vector<1x16x32xf32>
    %148 = vector.shape_cast %147 : vector<1x16x32xf32> to vector<16x32xf32>
    %149 = vector.shape_cast %141 : vector<16x32xf32> to vector<1x16x32xf32>
    tpu.vector_store %arg3[%c3_54, %c0_55, %c0_56], %149 {strides = array<i32>} : memref<4x16x64xf32, #tpu.memory_space<vmem>>, vector<1x16x32xf32>,
    %c3_57 = arith.constant 3 : index
    %c0_58 = arith.constant 0 : index
    %c32_59 = arith.constant 32 : index
    %150 = vector.load %arg3[%c3_57, %c0_58, %c32_59] : memref<4x16x64xf32, #tpu.memory_space<vmem>>, vector<1x16x32xf32>
    %151 = vector.shape_cast %150 : vector<1x16x32xf32> to vector<16x32xf32>
    %152 = vector.shape_cast %146 : vector<16x32xf32> to vector<1x16x32xf32>
    tpu.vector_store %arg3[%c3_57, %c0_58, %c32_59], %152 {strides = array<i32>} : memref<4x16x64xf32, #tpu.memory_space<vmem>>, vector<1x16x32xf32>,
    return
  }
  func.func @transform_0(%arg0: i32) -> (i32, i32, i32) {
    %c0_i32 = arith.constant 0 : i32
    %c0_i32_0 = arith.constant 0 : i32
    %c0_i32_1 = arith.constant 0 : i32
    return %arg0, %c0_i32, %c0_i32_0 : i32, i32, i32
  }
  func.func @transform_1(%arg0: i32) -> (i32, i32) {
    %c0_i32 = arith.constant 0 : i32
    %c0_i32_0 = arith.constant 0 : i32
    %c0_i32_1 = arith.constant 0 : i32
    return %c0_i32, %c0_i32_0 : i32, i32
  }
  func.func @transform_2(%arg0: i32) -> (i32, i32, i32) {
    %c0_i32 = arith.constant 0 : i32
    %c0_i32_0 = arith.constant 0 : i32
    %c0_i32_1 = arith.constant 0 : i32
    return %arg0, %c0_i32, %c0_i32_0 : i32, i32, i32
  }
}

</mosaic_0001>

<llo_original>
// kernel: tpu_custom_call.1
$region0: #{tpu_custom_call.1}
  #allocation0 [shape = 'u32[]', space=smem, size = 0x4, offset = 0x4, fixed_abs, tag = 'smem constant byte address 0x4 - core index']
  #allocation1 [shape = 'u32[144,128]{1,0:T(1,128)}', space=vmem, size = 0x12000, scoped, tag = 'internal scratch']
  %s0 = inlined_call_operand.hbm [shape: f32[8,16,16], index: 0, kind: input, shape index: {}]
  %s1 = inlined_call_operand.hbm [shape: f32[18,32], index: 1, kind: input, shape index: {}]
  %s2 = inlined_call_operand.hbm [shape: f32[8,16,64], index: 2, kind: output, shape index: {}]
  %s3 = sld [smem:[#allocation0]]
  $region49: #{tpu_custom_call.1} parent=0
    _
  %s5 = ssub.s32 1, %s3
  %s6 = scalar_select 0, %s5, %s3
  $region1: #{tpu_custom_call.1} parent=0
    #allocation2 [shape = 'u8[65536]{0}', space=vmem, size = 0x10000, scoped, tag = 'input window, operand 0']
    #allocation3 [shape = 's32[2]{0}', space=sflag, size = 0x8, scoped, tag = 'scoped memory for tpu_custom_call.1']
    #allocation4 [shape = 's32[2]{0}', space=sflag, size = 0x8, scoped, tag = 'scoped memory for tpu_custom_call.1']
    #allocation5 [shape = 'u8[12288]{0}', space=vmem, size = 0x3000, scoped, tag = 'input window, operand 1, single buffered']
    #allocation6 [shape = 's32[1]{0}', space=sflag, size = 0x4, scoped, tag = 'scoped memory for tpu_custom_call.1']
    #allocation7 [shape = 'u8[65536]{0}', space=vmem, size = 0x10000, scoped, tag = 'output window, operand 0']
    %7 = vsyncpa [#allocation3], 0
    %s8 = scalar_lea.sflag [#allocation3], 1
    %9 = vsyncpa %s8, 0
    %10 = vsyncpa [#allocation6], 0
    %11 = vsyncpa [#allocation4], 0
    %s12 = scalar_lea.sflag [#allocation4], 1
    %13 = vsyncpa %s12, 0
    loop: start=0, step=1, limit=4
    $region2: #{tpu_custom_call.1} parent=1 // loop_pre_header
      _
    $region3: #{tpu_custom_call.1} parent=1 // loop_header
      %s15 = sphi 0, %s19
      %p16 = scmp.ge.s32.totalorder %s15, 4
      %s25 = sphi 0, %s27
      %s28 = sphi 0, %s25
      %s29 = sphi 0, %s28
      %s45 = sphi 0, %s29
      %s49 = sphi 0, %s49
      %s51 = sphi 0, %s49
      %s52 = sphi 0, %s51
      %s66 = sphi 0, %s52
      %s72 = sphi 0, %s74
      %s75 = sphi 0, %s72
      %s76 = sphi 0, %s75
      %s92 = sphi 0, %s76
    $region4: #{tpu_custom_call.1} parent=1 // loop_header_branch
      %18 = sbr.rel (%p16) target = $region8
    $region5: #{tpu_custom_call.1} parent=1 // loop_body
      %s20 = ssub.s32 %s15, 1
      %s21 = ssub.s32 %s15, 2
      %s22 = sadd.s32 %s15, 1
      %s23 = ssub.s32 %s15, %s22
      %p24 = scmp.eq.s32.totalorder %s23, 0
      %s26 = sadd.s32 %s25, 1
      %s27 = scalar_select %p24, %s25, %s26
      %p30 = pneg %p24
      %p31 = scmp.eq.s32.totalorder %s15, 1
      %p32 = por %p30, %p31
      %p33 = scmp.ne.s32.totalorder %s25, %s28
      %p34 = scmp.eq.s32.totalorder %s15, 0
      %p35 = por %p33, %p34
      %p36 = scmp.ne.s32.totalorder %s25, %s28
      %p37 = scmp.eq.s32.totalorder %s20, 1
      %p38 = por %p36, %p37
      %p39 = scmp.ne.s32.totalorder %s28, %s29
      %p40 = scmp.eq.s32.totalorder %s20, 0
      %p41 = por %p39, %p40
      %p42 = scmp.ne.s32.totalorder %s28, %s29
      %p43 = scmp.eq.s32.totalorder %s21, 1
      %p44 = por %p42, %p43
      %p46 = scmp.ne.s32.totalorder %s29, %s45
      %p47 = scmp.eq.s32.totalorder %s21, 0
      %p48 = por %p46, %p47
      %s50 = sadd.s32 %s49, 1
      %p53 = scmp.eq.s32.totalorder %s15, 1
      %p54 = scmp.ne.s32.totalorder %s49, %s51
      %p55 = scmp.eq.s32.totalorder %s15, 0
      %p56 = por %p54, %p55
      %p57 = scmp.ne.s32.totalorder %s49, %s51
      %p58 = scmp.eq.s32.totalorder %s20, 1
      %p59 = por %p57, %p58
      %p60 = scmp.ne.s32.totalorder %s51, %s52
      %p61 = scmp.eq.s32.totalorder %s20, 0
      %p62 = por %p60, %p61
      %p63 = scmp.ne.s32.totalorder %s51, %s52
      %p64 = scmp.eq.s32.totalorder %s21, 1
      %p65 = por %p63, %p64
      %p67 = scmp.ne.s32.totalorder %s52, %s66
      %p68 = scmp.eq.s32.totalorder %s21, 0
      %p69 = por %p67, %p68
      %s70 = ssub.s32 %s15, %s22
      %p71 = scmp.eq.s32.totalorder %s70, 0
      %s73 = sadd.s32 %s72, 1
      %s74 = scalar_select %p71, %s72, %s73
      %p77 = pneg %p71
      %p78 = scmp.eq.s32.totalorder %s15, 1
      %p79 = por %p77, %p78
      %p80 = scmp.ne.s32.totalorder %s72, %s75
      %p81 = scmp.eq.s32.totalorder %s15, 0
      %p82 = por %p80, %p81
      %p83 = scmp.ne.s32.totalorder %s72, %s75
      %p84 = scmp.eq.s32.totalorder %s20, 1
      %p85 = por %p83, %p84
      %p86 = scmp.ne.s32.totalorder %s75, %s76
      %p87 = scmp.eq.s32.totalorder %s20, 0
      %p88 = por %p86, %p87
      %p89 = scmp.ne.s32.totalorder %s75, %s76
      %p90 = scmp.eq.s32.totalorder %s21, 1
      %p91 = por %p89, %p90
      %p93 = scmp.ne.s32.totalorder %s76, %s92
      %p94 = scmp.eq.s32.totalorder %s21, 0
      %p95 = por %p93, %p94
      %p96 = scmp.le.s32.totalorder 1, %s15
      %p97 = scmp.lt.s32.totalorder %s15, 3
      %p98 = pnand %p96, %p97
      %p99 = pneg %p98
      // Predicated region
      $region9: #{tpu_custom_call.1} parent=5 // pred_check
        _
      $region10: #{tpu_custom_call.1} parent=5 // pred_check_branch
        %101 = sbr.rel (%p98) target = $region12
      $region11: #{tpu_custom_call.1} parent=5 // pred_region
        %s102 = ssub.s32 %s15, 1
        // Predicated region
        $region13: #{tpu_custom_call.1} parent=11 // pred_check
          %p103 = pneg %p62
        $region14: #{tpu_custom_call.1} parent=11 // pred_check_branch
          %105 = sbr.rel (%p103) target = $region16
        $region15: #{tpu_custom_call.1} parent=11 // pred_region
          %s107 = ssub.s32 384, 384
          %108 = vsyncadd [#allocation6], %s107
          %s109 = sshll.u32 [#allocation5], 4
          %s110 = int_to_ptr.vmem [resolvable:$true] %s109
          %115 = dma.hbm_to_vmem [thread:$0]  %s1, 384, %s110, [#allocation6], 128, 128, 8
        $region16: #{tpu_custom_call.1} parent=11 // pred_fallthru
          _
      $region12: #{tpu_custom_call.1} parent=5 // pred_fallthru
        _
      %p116 = scmp.lt.s32.totalorder %s15, 2
      // Predicated region
      $region17: #{tpu_custom_call.1} parent=5 // pred_check
        %p117 = pneg %p116
      $region18: #{tpu_custom_call.1} parent=5 // pred_check_branch
        %119 = sbr.rel (%p117) target = $region20
      $region19: #{tpu_custom_call.1} parent=5 // pred_region
        // Predicated region
        $region21: #{tpu_custom_call.1} parent=19 // pred_check
          %p120 = pneg %p35
        $region22: #{tpu_custom_call.1} parent=19 // pred_check_branch
          %122 = sbr.rel (%p120) target = $region24
        $region23: #{tpu_custom_call.1} parent=19 // pred_region
          %s123 = sand.u32 %s25, 1
          %s124 = scalar_lea.sflag [#allocation3], %s123
          %s125 = sand.u32 %s25, 1
          %s126 = smul.addr %s125, 64
          %s127 = scalar_lea.vmem [#allocation2], %s126
          %s128 = smul.u32 4, %s15
          %s130 = ssub.s32 1024, 1024
          %131 = vsyncadd %s124, %s130
          %s132 = smul.addr %s128, 2
          %s133 = smul.addr %s132, 128
          %s134 = scalar_lea.hbm %s0, %s133
          %s135 = sshll.u32 %s127, 4
          %s136 = int_to_ptr.vmem [resolvable:$true] %s135
          %141 = dma.hbm_to_vmem [thread:$0]  %s134, 1024, %s136, %s124, 128, 128, 8
        $region24: #{tpu_custom_call.1} parent=19 // pred_fallthru
          _
      $region20: #{tpu_custom_call.1} parent=5 // pred_fallthru
        _
      %p142 = scmp.le.s32.totalorder 1, %s15
      %p143 = scmp.lt.s32.totalorder %s15, 3
      %p144 = pnand %p142, %p143
      %p145 = pneg %p144
      // Predicated region
      $region25: #{tpu_custom_call.1} parent=5 // pred_check
        _
      $region26: #{tpu_custom_call.1} parent=5 // pred_check_branch
        %147 = sbr.rel (%p144) target = $region28
      $region27: #{tpu_custom_call.1} parent=5 // pred_region
        %s148 = ssub.s32 %s15, 1
        %s149 = sand.u32 %s28, 1
        %s150 = scalar_lea.sflag [#allocation3], %s149
        %s151 = sand.u32 %s28, 1
        %s152 = smul.addr %s151, 64
        %s153 = scalar_lea.vmem [#allocation2], %s152
        // Predicated region
        $region29: #{tpu_custom_call.1} parent=27 // pred_check
          %p154 = pneg %p41
        $region30: #{tpu_custom_call.1} parent=27 // pred_check_branch
          %156 = sbr.rel (%p154) target = $region32
        $region31: #{tpu_custom_call.1} parent=27 // pred_region
          %157 = dma.done %s150, 1024
        $region32: #{tpu_custom_call.1} parent=27 // pred_fallthru
          _
        // Predicated region
        $region33: #{tpu_custom_call.1} parent=27 // pred_check
          %p158 = pneg %p62
        $region34: #{tpu_custom_call.1} parent=27 // pred_check_branch
          %160 = sbr.rel (%p158) target = $region36
        $region35: #{tpu_custom_call.1} parent=27 // pred_region
          %161 = dma.done [#allocation6], 384
        $region36: #{tpu_custom_call.1} parent=27 // pred_fallthru
          _
        %s162 = sand.u32 %s28, 1
        %s163 = scalar_lea.sflag [#allocation3], %s162
        %s164 = sand.u32 %s28, 1
        %s165 = smul.addr %s164, 64
        %s166 = scalar_lea.vmem [#allocation2], %s165
        %p167 = pneg %p41
        %p168 = pneg %p38
        %p169 = pneg %p62
        %p170 = pneg %p59
        %p171 = pneg %p88
        %p172 = pneg %p85
        %s173 = sand.u32 %s75, 1
        %s174 = scalar_lea.sflag [#allocation4], %s173
        %s175 = sand.u32 %s75, 1
        %s176 = smul.addr %s175, 64
        %s177 = scalar_lea.vmem [#allocation7], %s176
        %s178 = smul.u32 4, %s20
        %s179 = smul.u32 4, %s20
        %v180 = vld [vmem:[#allocation5] sm:$0xff]
        %v181 = vld [vmem:[#allocation5 + $0x8] sm:$0xff]
        %v182 = vld [vmem:[#allocation5 + $0x10] sm:$0x3]
        %v183 = vld [vmem:[%s153] sm:$0xff]
        %v184 = vld [vmem:[%s153 + $0x8] sm:$0xff]
        %187 = vrot.lane.b32.xlu0 %v183, 1
        %v188 = vpop.permute.xlu0 %187
        %189 = vrot.lane.b32.xlu0 %v184, 1
        %v190 = vpop.permute.xlu0 %189
        %193 = vrot.lane.b32.xlu0 %v183, 2
        %v194 = vpop.permute.xlu0 %193
        %195 = vrot.lane.b32.xlu0 %v184, 2
        %v196 = vpop.permute.xlu0 %195
        %vm199 = vcmask 7168
        %v200 = vsel %vm199, %v183, %v188
        %v201 = vsel %vm199, %v184, %v190
        %vm202 = vcmask 138240
        %v203 = vsel %vm202, %v200, %v194
        %v204 = vsel %vm202, %v201, %v196
        %v205 = vpack.c.bf16 %v204, %v203
        %v206 = vunpack.c.l.bf16 %v205
        %v207 = vunpack.c.h.bf16 %v205
        %v208 = vsub.f32 %v203, %v206
        %v209 = vsub.f32 %v204, %v207
        %v210 = vpack.c.bf16 %v209, %v208
        %v211 = vunpack.c.l.bf16 %v210
        %v212 = vunpack.c.h.bf16 %v210
        %v213 = vsub.f32 %v208, %v211
        %v214 = vsub.f32 %v209, %v212
        %vm215 = vcmask 146432
        %v217 = vsel %vm215, %v211, 0
        %v220 = vsel %vm215, %v212, 0
        %vm222 = vcmask 1041408
        %v224 = vsel %vm222, %v182, 0
        %226 = vmatprep.subr.mxu0 0.0
        %227 = vmatpush1.msra.mxu0 %v180
        %228 = vmatprep.subr.mxu0 0.0
        %229 = vmatpush1.msra.mxu0 %v181
        %230 = vmatprep.subr.mxu0 0.0
        %231 = vmatpush1.msra.mxu0 %v224
        %232 = vmatprep.subr.mxu0 0.0
        %233 = vmatpush1.msra.mxu0 0.0
        %234 = vmatprep.subr.mxu0 0.0
        %235 = vmatpush1.msra.mxu0 0.0
        %236 = vmatprep.subr.mxu0 0.0
        %237 = vmatpush1.msra.mxu0 0.0
        %238 = vmatprep.subr.mxu0 0.0
        %239 = vmatpush1.msra.mxu0 0.0
        %240 = vmatprep.subr.mxu0 0.0
        %241 = vmatpush1.msra.mxu0 0.0
        %242 = vmatprep.subr.mxu0 0.0
        %243 = vmatpush1.msra.mxu0 0.0
        %244 = vmatprep.subr.mxu0 0.0
        %245 = vmatpush1.msra.mxu0 0.0
        %246 = vmatprep.subr.mxu0 0.0
        %247 = vmatpush1.msra.mxu0 0.0
        %248 = vmatprep.subr.mxu0 0.0
        %249 = vmatpush1.msra.mxu0 0.0
        %250 = vmatprep.subr.mxu0 0.0
        %251 = vmatpush1.msra.mxu0 0.0
        %252 = vmatprep.subr.mxu0 0.0
        %253 = vmatpush1.msra.mxu0 0.0
        %254 = vmatprep.subr.mxu0 0.0
        %255 = vmatpush1.msra.mxu0 0.0
        %256 = vmatprep.subr.mxu0 0.0
        %257 = vmatpush1.msra.mxu0 0.0
        %258 = vmatprep.subr.mxu0 0.0
        %259 = vmatpush1.msra.mxu0 0.0
        %260 = vmatprep.subr.mxu0 0.0
        %261 = vmatpush1.msra.mxu0 0.0
        %262 = vmatprep.subr.mxu0 0.0
        %263 = vmatpush1.msra.mxu0 0.0
        %264 = vmatprep.subr.mxu0 0.0
        %265 = vmatpush1.msra.mxu0 0.0
        %266 = vmatprep.subr.mxu0 0.0
        %267 = vmatpush1.msra.mxu0 0.0
        %268 = vmatprep.subr.mxu0 0.0
        %269 = vmatpush1.msra.mxu0 0.0
        %270 = vmatprep.subr.mxu0 0.0
        %271 = vmatpush1.msra.mxu0 0.0
        %272 = vmatprep.subr.mxu0 0.0
        %273 = vmatpush1.msra.mxu0 0.0
        %274 = vmatprep.subr.mxu0 0.0
        %275 = vmatpush1.msra.mxu0 0.0
        %276 = vmatprep.subr.mxu0 0.0
        %277 = vmatpush1.msra.mxu0 0.0
        %278 = vmatprep.subr.mxu0 0.0
        %279 = vmatpush1.msra.mxu0 0.0
        %280 = vmatprep.subr.mxu0 0.0
        %281 = vmatpush1.msra.mxu0 0.0
        %282 = vmatprep.subr.mxu0 0.0
        %283 = vmatpush1.msra.mxu0 0.0
        %284 = vmatprep.subr.mxu0 0.0
        %285 = vmatpush1.msra.mxu0 0.0
        %286 = vmatprep.subr.mxu0 0.0
        %287 = vmatpush1.msra.mxu0 0.0
        %288 = vmatprep.subr.mxu0 0.0
        %289 = vmatpush1.msra.mxu0 0.0
        %290 = vmatprep.mubr.f32.mxu0 0.0
        %291 = vmatmul.mubr.f32.gmra.mrb[0].mxu0 %v217
        %v292 = vpop.f32.mrb[0].mxu0
        %v293 = vadd.f32 0.0, %v292
        %v294 = vpop.f32.mrb[0].mxu0
        %295 = vmatprep.mubr.f32.mxu0 0.0
        %296 = vmatmul.mubr.f32.gmra.mrb[0].mxu0 %v220
        %v297 = vpop.f32.mrb[0].mxu0
        %v298 = vadd.f32 0.0, %v297
        %v299 = vpop.f32.mrb[0].mxu0
        %300 = vdwg.mxu0
        %v302 = vsel %vm215, %v206, 0
        %v305 = vsel %vm215, %v207, 0
        %307 = vmatprep.subr.mxu0 0.0
        %308 = vmatpush1.msra.mxu0 %v180
        %309 = vmatprep.subr.mxu0 0.0
        %310 = vmatpush1.msra.mxu0 %v181
        %311 = vmatprep.subr.mxu0 0.0
        %312 = vmatpush1.msra.mxu0 %v224
        %313 = vmatprep.subr.mxu0 0.0
        %314 = vmatpush1.msra.mxu0 0.0
        %315 = vmatprep.subr.mxu0 0.0
        %316 = vmatpush1.msra.mxu0 0.0
        %317 = vmatprep.subr.mxu0 0.0
        %318 = vmatpush1.msra.mxu0 0.0
        %319 = vmatprep.subr.mxu0 0.0
        %320 = vmatpush1.msra.mxu0 0.0
        %321 = vmatprep.subr.mxu0 0.0
        %322 = vmatpush1.msra.mxu0 0.0
        %323 = vmatprep.subr.mxu0 0.0
        %324 = vmatpush1.msra.mxu0 0.0
        %325 = vmatprep.subr.mxu0 0.0
        %326 = vmatpush1.msra.mxu0 0.0
        %327 = vmatprep.subr.mxu0 0.0
        %328 = vmatpush1.msra.mxu0 0.0
        %329 = vmatprep.subr.mxu0 0.0
        %330 = vmatpush1.msra.mxu0 0.0
        %331 = vmatprep.subr.mxu0 0.0
        %332 = vmatpush1.msra.mxu0 0.0
        %333 = vmatprep.subr.mxu0 0.0
        %334 = vmatpush1.msra.mxu0 0.0
        %335 = vmatprep.subr.mxu0 0.0
        %336 = vmatpush1.msra.mxu0 0.0
        %337 = vmatprep.subr.mxu0 0.0
        %338 = vmatpush1.msra.mxu0 0.0
        %339 = vmatprep.subr.mxu0 0.0
        %340 = vmatpush1.msra.mxu0 0.0
        %341 = vmatprep.subr.mxu0 0.0
        %342 = vmatpush1.msra.mxu0 0.0
        %343 = vmatprep.subr.mxu0 0.0
        %344 = vmatpush1.msra.mxu0 0.0
        %345 = vmatprep.subr.mxu0 0.0
        %346 = vmatpush1.msra.mxu0 0.0
        %347 = vmatprep.subr.mxu0 0.0
        %348 = vmatpush1.msra.mxu0 0.0
        %349 = vmatprep.subr.mxu0 0.0
        %350 = vmatpush1.msra.mxu0 0.0
        %351 = vmatprep.subr.mxu0 0.0
        %352 = vmatpush1.msra.mxu0 0.0
        %353 = vmatprep.subr.mxu0 0.0
        %354 = vmatpush1.msra.mxu0 0.0
        %355 = vmatprep.subr.mxu0 0.0
        %356 = vmatpush1.msra.mxu0 0.0
        %357 = vmatprep.subr.mxu0 0.0
        %358 = vmatpush1.msra.mxu0 0.0
        %359 = vmatprep.subr.mxu0 0.0
        %360 = vmatpush1.msra.mxu0 0.0
        %361 = vmatprep.subr.mxu0 0.0
        %362 = vmatpush1.msra.mxu0 0.0
        %363 = vmatprep.subr.mxu0 0.0
        %364 = vmatpush1.msra.mxu0 0.0
        %365 = vmatprep.subr.mxu0 0.0
        %366 = vmatpush1.msra.mxu0 0.0
        %367 = vmatprep.subr.mxu0 0.0
        %368 = vmatpush1.msra.mxu0 0.0
        %369 = vmatprep.subr.mxu0 0.0
        %370 = vmatpush1.msra.mxu0 0.0
        %371 = vmatprep.mubr.f32.mxu0 0.0
        %372 = vmatmul.mubr.f32.gmra.mrb[0].mxu0 %v302
        %v373 = vpop.f32.mrb[0].mxu0
        %v374 = vadd.f32 %v293, %v373
        %v375 = vpop.f32.mrb[0].mxu0
        %376 = vmatprep.mubr.f32.mxu0 0.0
        %377 = vmatmul.mubr.f32.gmra.mrb[0].mxu0 %v305
        %v378 = vpop.f32.mrb[0].mxu0
        %v379 = vadd.f32 %v298, %v378
        %v380 = vpop.f32.mrb[0].mxu0
        %381 = vdwg.mxu0
        %v383 = vsel %vm215, %v213, 0
        %v386 = vsel %vm215, %v214, 0
        %388 = vmatprep.subr.mxu0 0.0
        %389 = vmatpush1.msra.mxu0 %v180
        %390 = vmatprep.subr.mxu0 0.0
        %391 = vmatpush1.msra.mxu0 %v181
        %392 = vmatprep.subr.mxu0 0.0
        %393 = vmatpush1.msra.mxu0 %v224
        %394 = vmatprep.subr.mxu0 0.0
        %395 = vmatpush1.msra.mxu0 0.0
        %396 = vmatprep.subr.mxu0 0.0
        %397 = vmatpush1.msra.mxu0 0.0
        %398 = vmatprep.subr.mxu0 0.0
        %399 = vmatpush1.msra.mxu0 0.0
        %400 = vmatprep.subr.mxu0 0.0
        %401 = vmatpush1.msra.mxu0 0.0
        %402 = vmatprep.subr.mxu0 0.0
        %403 = vmatpush1.msra.mxu0 0.0
        %404 = vmatprep.subr.mxu0 0.0
        %405 = vmatpush1.msra.mxu0 0.0
        %406 = vmatprep.subr.mxu0 0.0
        %407 = vmatpush1.msra.mxu0 0.0
        %408 = vmatprep.subr.mxu0 0.0
        %409 = vmatpush1.msra.mxu0 0.0
        %410 = vmatprep.subr.mxu0 0.0
        %411 = vmatpush1.msra.mxu0 0.0
        %412 = vmatprep.subr.mxu0 0.0
        %413 = vmatpush1.msra.mxu0 0.0
        %414 = vmatprep.subr.mxu0 0.0
        %415 = vmatpush1.msra.mxu0 0.0
        %416 = vmatprep.subr.mxu0 0.0
        %417 = vmatpush1.msra.mxu0 0.0
        %418 = vmatprep.subr.mxu0 0.0
        %419 = vmatpush1.msra.mxu0 0.0
        %420 = vmatprep.subr.mxu0 0.0
        %421 = vmatpush1.msra.mxu0 0.0
        %422 = vmatprep.subr.mxu0 0.0
        %423 = vmatpush1.msra.mxu0 0.0
        %424 = vmatprep.subr.mxu0 0.0
        %425 = vmatpush1.msra.mxu0 0.0
        %426 = vmatprep.subr.mxu0 0.0
        %427 = vmatpush1.msra.mxu0 0.0
        %428 = vmatprep.subr.mxu0 0.0
        %429 = vmatpush1.msra.mxu0 0.0
        %430 = vmatprep.subr.mxu0 0.0
        %431 = vmatpush1.msra.mxu0 0.0
        %432 = vmatprep.subr.mxu0 0.0
        %433 = vmatpush1.msra.mxu0 0.0
        %434 = vmatprep.subr.mxu0 0.0
        %435 = vmatpush1.msra.mxu0 0.0
        %436 = vmatprep.subr.mxu0 0.0
        %437 = vmatpush1.msra.mxu0 0.0
        %438 = vmatprep.subr.mxu0 0.0
        %439 = vmatpush1.msra.mxu0 0.0
        %440 = vmatprep.subr.mxu0 0.0
        %441 = vmatpush1.msra.mxu0 0.0
        %442 = vmatprep.subr.mxu0 0.0
        %443 = vmatpush1.msra.mxu0 0.0
        %444 = vmatprep.subr.mxu0 0.0
        %445 = vmatpush1.msra.mxu0 0.0
        %446 = vmatprep.subr.mxu0 0.0
        %447 = vmatpush1.msra.mxu0 0.0
        %448 = vmatprep.subr.mxu0 0.0
        %449 = vmatpush1.msra.mxu0 0.0
        %450 = vmatprep.subr.mxu0 0.0
        %451 = vmatpush1.msra.mxu0 0.0
        %452 = vmatprep.mubr.f32.mxu0 0.0
        %453 = vmatmul.mubr.f32.gmra.mrb[0].mxu0 %v383
        %v454 = vpop.f32.mrb[0].mxu0
        %v455 = vadd.f32 0.0, %v454
        %v456 = vpop.f32.mrb[0].mxu0
        %457 = vmatprep.mubr.f32.mxu0 0.0
        %458 = vmatmul.mubr.f32.gmra.mrb[0].mxu0 %v386
        %v459 = vpop.f32.mrb[0].mxu0
        %v460 = vadd.f32 0.0, %v459
        %v461 = vpop.f32.mrb[0].mxu0
        %462 = vdwg.mxu0
        %v463 = vadd.f32 %v374, %v455
        %v464 = vadd.f32 %v379, %v460
        %vm467 = vcmask 1040384
        %v468 = vrot.slane %v463, 7
        %v469 = vrot.slane %v464, 7
        %v470 = vsel %vm467, %v468, %v469
        %v473 = vsel %vm467, %v463, %v468
        %vm474 = vcmask 1046528
        %v475 = vrot.slane %v463, 1
        %v476 = vrot.slane %v464, 1
        %v477 = vsel %vm474, %v475, %v476
        %v480 = vsel %vm474, %v476, %v464
        %v481 = vmul.f32 %v473, 0.25
        %v482 = vmul.f32 %v470, 0.25
        %v483 = vmul.f32 %v463, 0.75
        %v484 = vmul.f32 %v464, 0.75
        %v485 = vadd.f32 %v481, %v483
        %v486 = vadd.f32 %v482, %v484
        %v487 = vmul.f32 %v477, 0.25
        %v488 = vmul.f32 %v480, 0.25
        %v489 = vadd.f32 %v483, %v487
        %v490 = vadd.f32 %v484, %v488
        %vm491 = vcmask 261120
        %492 = vst.msk [vmem:[%s177] sm:$0xff] %vm491, %v485
        %493 = vst.msk [vmem:[%s177 + $0x8] sm:$0xff] %vm491, %v486
        %496 = vrot.lane.b32.xlu0 %v489, 32
        %v497 = vpop.permute.xlu0 %496
        %498 = vrot.lane.b32.xlu0 %v490, 32
        %v499 = vpop.permute.xlu0 %498
        %vm502 = vcmask 523520
        %503 = vst.msk [vmem:[%s177] sm:$0xff] %vm502, %v497
        %504 = vst.msk [vmem:[%s177 + $0x8] sm:$0xff] %vm502, %v499
        %s505 = scalar_lea.vmem %s153, 16 [#allocation2]
        %v506 = vld [vmem:[%s505] sm:$0xff]
        %v507 = vld [vmem:[%s505 + $0x8] sm:$0xff]
        %510 = vrot.lane.b32.xlu0 %v506, 1
        %v511 = vpop.permute.xlu0 %510
        %512 = vrot.lane.b32.xlu0 %v507, 1
        %v513 = vpop.permute.xlu0 %512
        %516 = vrot.lane.b32.xlu0 %v506, 2
        %v517 = vpop.permute.xlu0 %516
        %518 = vrot.lane.b32.xlu0 %v507, 2
        %v519 = vpop.permute.xlu0 %518
        %v522 = vsel %vm199, %v506, %v511
        %v523 = vsel %vm199, %v507, %v513
        %v524 = vsel %vm202, %v522, %v517
        %v525 = vsel %vm202, %v523, %v519
        %v526 = vpack.c.bf16 %v525, %v524
        %v527 = vunpack.c.l.bf16 %v526
        %v528 = vunpack.c.h.bf16 %v526
        %v529 = vsub.f32 %v524, %v527
        %v530 = vsub.f32 %v525, %v528
        %v531 = vpack.c.bf16 %v530, %v529
        %v532 = vunpack.c.l.bf16 %v531
        %v533 = vunpack.c.h.bf16 %v531
        %v534 = vsub.f32 %v529, %v532
        %v535 = vsub.f32 %v530, %v533
        %v537 = vsel %vm215, %v532, 0
        %v540 = vsel %vm215, %v533, 0
        %542 = vmatprep.subr.mxu0 0.0
        %543 = vmatpush1.msra.mxu0 %v180
        %544 = vmatprep.subr.mxu0 0.0
        %545 = vmatpush1.msra.mxu0 %v181
        %546 = vmatprep.subr.mxu0 0.0
        %547 = vmatpush1.msra.mxu0 %v224
        %548 = vmatprep.subr.mxu0 0.0
        %549 = vmatpush1.msra.mxu0 0.0
        %550 = vmatprep.subr.mxu0 0.0
        %551 = vmatpush1.msra.mxu0 0.0
        %552 = vmatprep.subr.mxu0 0.0
        %553 = vmatpush1.msra.mxu0 0.0
        %554 = vmatprep.subr.mxu0 0.0
        %555 = vmatpush1.msra.mxu0 0.0
        %556 = vmatprep.subr.mxu0 0.0
        %557 = vmatpush1.msra.mxu0 0.0
        %558 = vmatprep.subr.mxu0 0.0
        %559 = vmatpush1.msra.mxu0 0.0
        %560 = vmatprep.subr.mxu0 0.0
        %561 = vmatpush1.msra.mxu0 0.0
        %562 = vmatprep.subr.mxu0 0.0
        %563 = vmatpush1.msra.mxu0 0.0
        %564 = vmatprep.subr.mxu0 0.0
        %565 = vmatpush1.msra.mxu0 0.0
        %566 = vmatprep.subr.mxu0 0.0
        %567 = vmatpush1.msra.mxu0 0.0
        %568 = vmatprep.subr.mxu0 0.0
        %569 = vmatpush1.msra.mxu0 0.0
        %570 = vmatprep.subr.mxu0 0.0
        %571 = vmatpush1.msra.mxu0 0.0
        %572 = vmatprep.subr.mxu0 0.0
        %573 = vmatpush1.msra.mxu0 0.0
        %574 = vmatprep.subr.mxu0 0.0
        %575 = vmatpush1.msra.mxu0 0.0
        %576 = vmatprep.subr.mxu0 0.0
        %577 = vmatpush1.msra.mxu0 0.0
        %578 = vmatprep.subr.mxu0 0.0
        %579 = vmatpush1.msra.mxu0 0.0
        %580 = vmatprep.subr.mxu0 0.0
        %581 = vmatpush1.msra.mxu0 0.0
        %582 = vmatprep.subr.mxu0 0.0
        %583 = vmatpush1.msra.mxu0 0.0
        %584 = vmatprep.subr.mxu0 0.0
        %585 = vmatpush1.msra.mxu0 0.0
        %586 = vmatprep.subr.mxu0 0.0
        %587 = vmatpush1.msra.mxu0 0.0
        %588 = vmatprep.subr.mxu0 0.0
        %589 = vmatpush1.msra.mxu0 0.0
        %590 = vmatprep.subr.mxu0 0.0
        %591 = vmatpush1.msra.mxu0 0.0
        %592 = vmatprep.subr.mxu0 0.0
        %593 = vmatpush1.msra.mxu0 0.0
        %594 = vmatprep.subr.mxu0 0.0
        %595 = vmatpush1.msra.mxu0 0.0
        %596 = vmatprep.subr.mxu0 0.0
        %597 = vmatpush1.msra.mxu0 0.0
        %598 = vmatprep.subr.mxu0 0.0
        %599 = vmatpush1.msra.mxu0 0.0
        %600 = vmatprep.subr.mxu0 0.0
        %601 = vmatpush1.msra.mxu0 0.0
        %602 = vmatprep.subr.mxu0 0.0
        %603 = vmatpush1.msra.mxu0 0.0
        %604 = vmatprep.subr.mxu0 0.0
        %605 = vmatpush1.msra.mxu0 0.0
        %606 = vmatprep.mubr.f32.mxu0 0.0
        %607 = vmatmul.mubr.f32.gmra.mrb[0].mxu0 %v537
        %v608 = vpop.f32.mrb[0].mxu0
        %v609 = vadd.f32 0.0, %v608
        %v610 = vpop.f32.mrb[0].mxu0
        %611 = vmatprep.mubr.f32.mxu0 0.0
        %612 = vmatmul.mubr.f32.gmra.mrb[0].mxu0 %v540
        %v613 = vpop.f32.mrb[0].mxu0
        %v614 = vadd.f32 0.0, %v613
        %v615 = vpop.f32.mrb[0].mxu0
        %616 = vdwg.mxu0
        %v618 = vsel %vm215, %v527, 0
        %v621 = vsel %vm215, %v528, 0
        %623 = vmatprep.subr.mxu0 0.0
        %624 = vmatpush1.msra.mxu0 %v180
        %625 = vmatprep.subr.mxu0 0.0
        %626 = vmatpush1.msra.mxu0 %v181
        %627 = vmatprep.subr.mxu0 0.0
        %628 = vmatpush1.msra.mxu0 %v224
        %629 = vmatprep.subr.mxu0 0.0
        %630 = vmatpush1.msra.mxu0 0.0
        %631 = vmatprep.subr.mxu0 0.0
        %632 = vmatpush1.msra.mxu0 0.0
        %633 = vmatprep.subr.mxu0 0.0
        %634 = vmatpush1.msra.mxu0 0.0
        %635 = vmatprep.subr.mxu0 0.0
        %636 = vmatpush1.msra.mxu0 0.0
        %637 = vmatprep.subr.mxu0 0.0
        %638 = vmatpush1.msra.mxu0 0.0
        %639 = vmatprep.subr.mxu0 0.0
        %640 = vmatpush1.msra.mxu0 0.0
        %641 = vmatprep.subr.mxu0 0.0
        %642 = vmatpush1.msra.mxu0 0.0
        %643 = vmatprep.subr.mxu0 0.0
        %644 = vmatpush1.msra.mxu0 0.0
        %645 = vmatprep.subr.mxu0 0.0
        %646 = vmatpush1.msra.mxu0 0.0
        %647 = vmatprep.subr.mxu0 0.0
        %648 = vmatpush1.msra.mxu0 0.0
        %649 = vmatprep.subr.mxu0 0.0
        %650 = vmatpush1.msra.mxu0 0.0
        %651 = vmatprep.subr.mxu0 0.0
        %652 = vmatpush1.msra.mxu0 0.0
        %653 = vmatprep.subr.mxu0 0.0
        %654 = vmatpush1.msra.mxu0 0.0
        %655 = vmatprep.subr.mxu0 0.0
        %656 = vmatpush1.msra.mxu0 0.0
        %657 = vmatprep.subr.mxu0 0.0
        %658 = vmatpush1.msra.mxu0 0.0
        %659 = vmatprep.subr.mxu0 0.0
        %660 = vmatpush1.msra.mxu0 0.0
        %661 = vmatprep.subr.mxu0 0.0
        %662 = vmatpush1.msra.mxu0 0.0
        %663 = vmatprep.subr.mxu0 0.0
        %664 = vmatpush1.msra.mxu0 0.0
        %665 = vmatprep.subr.mxu0 0.0
        %666 = vmatpush1.msra.mxu0 0.0
        %667 = vmatprep.subr.mxu0 0.0
        %668 = vmatpush1.msra.mxu0 0.0
        %669 = vmatprep.subr.mxu0 0.0
        %670 = vmatpush1.msra.mxu0 0.0
        %671 = vmatprep.subr.mxu0 0.0
        %672 = vmatpush1.msra.mxu0 0.0
        %673 = vmatprep.subr.mxu0 0.0
        %674 = vmatpush1.msra.mxu0 0.0
        %675 = vmatprep.subr.mxu0 0.0
        %676 = vmatpush1.msra.mxu0 0.0
        %677 = vmatprep.subr.mxu0 0.0
        %678 = vmatpush1.msra.mxu0 0.0
        %679 = vmatprep.subr.mxu0 0.0
        %680 = vmatpush1.msra.mxu0 0.0
        %681 = vmatprep.subr.mxu0 0.0
        %682 = vmatpush1.msra.mxu0 0.0
        %683 = vmatprep.subr.mxu0 0.0
        %684 = vmatpush1.msra.mxu0 0.0
        %685 = vmatprep.subr.mxu0 0.0
        %686 = vmatpush1.msra.mxu0 0.0
        %687 = vmatprep.mubr.f32.mxu0 0.0
        %688 = vmatmul.mubr.f32.gmra.mrb[0].mxu0 %v618
        %v689 = vpop.f32.mrb[0].mxu0
        %v690 = vadd.f32 %v609, %v689
        %v691 = vpop.f32.mrb[0].mxu0
        %692 = vmatprep.mubr.f32.mxu0 0.0
        %693 = vmatmul.mubr.f32.gmra.mrb[0].mxu0 %v621
        %v694 = vpop.f32.mrb[0].mxu0
        %v695 = vadd.f32 %v614, %v694
        %v696 = vpop.f32.mrb[0].mxu0
        %697 = vdwg.mxu0
        %v699 = vsel %vm215, %v534, 0
        %v702 = vsel %vm215, %v535, 0
        %704 = vmatprep.subr.mxu0 0.0
        %705 = vmatpush1.msra.mxu0 %v180
        %706 = vmatprep.subr.mxu0 0.0
        %707 = vmatpush1.msra.mxu0 %v181
        %708 = vmatprep.subr.mxu0 0.0
        %709 = vmatpush1.msra.mxu0 %v224
        %710 = vmatprep.subr.mxu0 0.0
        %711 = vmatpush1.msra.mxu0 0.0
        %712 = vmatprep.subr.mxu0 0.0
        %713 = vmatpush1.msra.mxu0 0.0
        %714 = vmatprep.subr.mxu0 0.0
        %715 = vmatpush1.msra.mxu0 0.0
        %716 = vmatprep.subr.mxu0 0.0
        %717 = vmatpush1.msra.mxu0 0.0
        %718 = vmatprep.subr.mxu0 0.0
        %719 = vmatpush1.msra.mxu0 0.0
        %720 = vmatprep.subr.mxu0 0.0
        %721 = vmatpush1.msra.mxu0 0.0
        %722 = vmatprep.subr.mxu0 0.0
        %723 = vmatpush1.msra.mxu0 0.0
        %724 = vmatprep.subr.mxu0 0.0
        %725 = vmatpush1.msra.mxu0 0.0
        %726 = vmatprep.subr.mxu0 0.0
        %727 = vmatpush1.msra.mxu0 0.0
        %728 = vmatprep.subr.mxu0 0.0
        %729 = vmatpush1.msra.mxu0 0.0
        %730 = vmatprep.subr.mxu0 0.0
        %731 = vmatpush1.msra.mxu0 0.0
        %732 = vmatprep.subr.mxu0 0.0
        %733 = vmatpush1.msra.mxu0 0.0
        %734 = vmatprep.subr.mxu0 0.0
        %735 = vmatpush1.msra.mxu0 0.0
        %736 = vmatprep.subr.mxu0 0.0
        %737 = vmatpush1.msra.mxu0 0.0
        %738 = vmatprep.subr.mxu0 0.0
        %739 = vmatpush1.msra.mxu0 0.0
        %740 = vmatprep.subr.mxu0 0.0
        %741 = vmatpush1.msra.mxu0 0.0
        %742 = vmatprep.subr.mxu0 0.0
        %743 = vmatpush1.msra.mxu0 0.0
        %744 = vmatprep.subr.mxu0 0.0
        %745 = vmatpush1.msra.mxu0 0.0
        %746 = vmatprep.subr.mxu0 0.0
        %747 = vmatpush1.msra.mxu0 0.0
        %748 = vmatprep.subr.mxu0 0.0
        %749 = vmatpush1.msra.mxu0 0.0
        %750 = vmatprep.subr.mxu0 0.0
        %751 = vmatpush1.msra.mxu0 0.0
        %752 = vmatprep.subr.mxu0 0.0
        %753 = vmatpush1.msra.mxu0 0.0
        %754 = vmatprep.subr.mxu0 0.0
        %755 = vmatpush1.msra.mxu0 0.0
        %756 = vmatprep.subr.mxu0 0.0
        %757 = vmatpush1.msra.mxu0 0.0
        %758 = vmatprep.subr.mxu0 0.0
        %759 = vmatpush1.msra.mxu0 0.0
        %760 = vmatprep.subr.mxu0 0.0
        %761 = vmatpush1.msra.mxu0 0.0
        %762 = vmatprep.subr.mxu0 0.0
        %763 = vmatpush1.msra.mxu0 0.0
        %764 = vmatprep.subr.mxu0 0.0
        %765 = vmatpush1.msra.mxu0 0.0
        %766 = vmatprep.subr.mxu0 0.0
        %767 = vmatpush1.msra.mxu0 0.0
        %768 = vmatprep.mubr.f32.mxu0 0.0
        %769 = vmatmul.mubr.f32.gmra.mrb[0].mxu0 %v699
        %v770 = vpop.f32.mrb[0].mxu0
        %v771 = vadd.f32 0.0, %v770
        %v772 = vpop.f32.mrb[0].mxu0
        %773 = vmatprep.mubr.f32.mxu0 0.0
        %774 = vmatmul.mubr.f32.gmra.mrb[0].mxu0 %v702
        %v775 = vpop.f32.mrb[0].mxu0
        %v776 = vadd.f32 0.0, %v775
        %v777 = vpop.f32.mrb[0].mxu0
        %778 = vdwg.mxu0
        %v779 = vadd.f32 %v690, %v771
        %v780 = vadd.f32 %v695, %v776
        %v783 = vrot.slane %v779, 7
        %v784 = vrot.slane %v780, 7
        %v785 = vsel %vm467, %v783, %v784
        %v788 = vsel %vm467, %v779, %v783
        %v789 = vrot.slane %v779, 1
        %v790 = vrot.slane %v780, 1
        %v791 = vsel %vm474, %v789, %v790
        %v794 = vsel %vm474, %v790, %v780
        %v795 = vmul.f32 %v788, 0.25
        %v796 = vmul.f32 %v785, 0.25
        %v797 = vmul.f32 %v779, 0.75
        %v798 = vmul.f32 %v780, 0.75
        %v799 = vadd.f32 %v795, %v797
        %v800 = vadd.f32 %v796, %v798
        %v801 = vmul.f32 %v791, 0.25
        %v802 = vmul.f32 %v794, 0.25
        %v803 = vadd.f32 %v797, %v801
        %v804 = vadd.f32 %v798, %v802
        %s805 = scalar_lea.vmem %s177, 16 [#allocation7]
        %806 = vst.msk [vmem:[%s805] sm:$0xff] %vm491, %v799
        %807 = vst.msk [vmem:[%s805 + $0x8] sm:$0xff] %vm491, %v800
        %810 = vrot.lane.b32.xlu0 %v803, 32
        %v811 = vpop.permute.xlu0 %810
        %812 = vrot.lane.b32.xlu0 %v804, 32
        %v813 = vpop.permute.xlu0 %812
        %816 = vst.msk [vmem:[%s805] sm:$0xff] %vm502, %v811
        %817 = vst.msk [vmem:[%s805 + $0x8] sm:$0xff] %vm502, %v813
        %s818 = scalar_lea.vmem %s153, 32 [#allocation2]
        %v819 = vld [vmem:[%s818] sm:$0xff]
        %v820 = vld [vmem:[%s818 + $0x8] sm:$0xff]
        %823 = vrot.lane.b32.xlu0 %v819, 1
        %v824 = vpop.permute.xlu0 %823
        %825 = vrot.lane.b32.xlu0 %v820, 1
        %v826 = vpop.permute.xlu0 %825
        %829 = vrot.lane.b32.xlu0 %v819, 2
        %v830 = vpop.permute.xlu0 %829
        %831 = vrot.lane.b32.xlu0 %v820, 2
        %v832 = vpop.permute.xlu0 %831
        %v835 = vsel %vm199, %v819, %v824
        %v836 = vsel %vm199, %v820, %v826
        %v837 = vsel %vm202, %v835, %v830
        %v838 = vsel %vm202, %v836, %v832
        %v839 = vpack.c.bf16 %v838, %v837
        %v840 = vunpack.c.l.bf16 %v839
        %v841 = vunpack.c.h.bf16 %v839
        %v842 = vsub.f32 %v837, %v840
        %v843 = vsub.f32 %v838, %v841
        %v844 = vpack.c.bf16 %v843, %v842
        %v845 = vunpack.c.l.bf16 %v844
        %v846 = vunpack.c.h.bf16 %v844
        %v847 = vsub.f32 %v842, %v845
        %v848 = vsub.f32 %v843, %v846
        %v850 = vsel %vm215, %v845, 0
        %v853 = vsel %vm215, %v846, 0
        %855 = vmatprep.subr.mxu0 0.0
        %856 = vmatpush1.msra.mxu0 %v180
        %857 = vmatprep.subr.mxu0 0.0
        %858 = vmatpush1.msra.mxu0 %v181
        %859 = vmatprep.subr.mxu0 0.0
        %860 = vmatpush1.msra.mxu0 %v224
        %861 = vmatprep.subr.mxu0 0.0
        %862 = vmatpush1.msra.mxu0 0.0
        %863 = vmatprep.subr.mxu0 0.0
        %864 = vmatpush1.msra.mxu0 0.0
        %865 = vmatprep.subr.mxu0 0.0
        %866 = vmatpush1.msra.mxu0 0.0
        %867 = vmatprep.subr.mxu0 0.0
        %868 = vmatpush1.msra.mxu0 0.0
        %869 = vmatprep.subr.mxu0 0.0
        %870 = vmatpush1.msra.mxu0 0.0
        %871 = vmatprep.subr.mxu0 0.0
        %872 = vmatpush1.msra.mxu0 0.0
        %873 = vmatprep.subr.mxu0 0.0
        %874 = vmatpush1.msra.mxu0 0.0
        %875 = vmatprep.subr.mxu0 0.0
        %876 = vmatpush1.msra.mxu0 0.0
        %877 = vmatprep.subr.mxu0 0.0
        %878 = vmatpush1.msra.mxu0 0.0
        %879 = vmatprep.subr.mxu0 0.0
        %880 = vmatpush1.msra.mxu0 0.0
        %881 = vmatprep.subr.mxu0 0.0
        %882 = vmatpush1.msra.mxu0 0.0
        %883 = vmatprep.subr.mxu0 0.0
        %884 = vmatpush1.msra.mxu0 0.0
        %885 = vmatprep.subr.mxu0 0.0
        %886 = vmatpush1.msra.mxu0 0.0
        %887 = vmatprep.subr.mxu0 0.0
        %888 = vmatpush1.msra.mxu0 0.0
        %889 = vmatprep.subr.mxu0 0.0
        %890 = vmatpush1.msra.mxu0 0.0
        %891 = vmatprep.subr.mxu0 0.0
        %892 = vmatpush1.msra.mxu0 0.0
        %893 = vmatprep.subr.mxu0 0.0
        %894 = vmatpush1.msra.mxu0 0.0
        %895 = vmatprep.subr.mxu0 0.0
        %896 = vmatpush1.msra.mxu0 0.0
        %897 = vmatprep.subr.mxu0 0.0
        %898 = vmatpush1.msra.mxu0 0.0
        %899 = vmatprep.subr.mxu0 0.0
        %900 = vmatpush1.msra.mxu0 0.0
        %901 = vmatprep.subr.mxu0 0.0
        %902 = vmatpush1.msra.mxu0 0.0
        %903 = vmatprep.subr.mxu0 0.0
        %904 = vmatpush1.msra.mxu0 0.0
        %905 = vmatprep.subr.mxu0 0.0
        %906 = vmatpush1.msra.mxu0 0.0
        %907 = vmatprep.subr.mxu0 0.0
        %908 = vmatpush1.msra.mxu0 0.0
        %909 = vmatprep.subr.mxu0 0.0
        %910 = vmatpush1.msra.mxu0 0.0
        %911 = vmatprep.subr.mxu0 0.0
        %912 = vmatpush1.msra.mxu0 0.0
        %913 = vmatprep.subr.mxu0 0.0
        %914 = vmatpush1.msra.mxu0 0.0
        %915 = vmatprep.subr.mxu0 0.0
        %916 = vmatpush1.msra.mxu0 0.0
        %917 = vmatprep.subr.mxu0 0.0
        %918 = vmatpush1.msra.mxu0 0.0
        %919 = vmatprep.mubr.f32.mxu0 0.0
        %920 = vmatmul.mubr.f32.gmra.mrb[0].mxu0 %v850
        %v921 = vpop.f32.mrb[0].mxu0
        %v922 = vadd.f32 0.0, %v921
        %v923 = vpop.f32.mrb[0].mxu0
        %924 = vmatprep.mubr.f32.mxu0 0.0
        %925 = vmatmul.mubr.f32.gmra.mrb[0].mxu0 %v853
        %v926 = vpop.f32.mrb[0].mxu0
        %v927 = vadd.f32 0.0, %v926
        %v928 = vpop.f32.mrb[0].mxu0
        %929 = vdwg.mxu0
        %v931 = vsel %vm215, %v840, 0
        %v934 = vsel %vm215, %v841, 0
        %936 = vmatprep.subr.mxu0 0.0
        %937 = vmatpush1.msra.mxu0 %v180
        %938 = vmatprep.subr.mxu0 0.0
        %939 = vmatpush1.msra.mxu0 %v181
        %940 = vmatprep.subr.mxu0 0.0
        %941 = vmatpush1.msra.mxu0 %v224
        %942 = vmatprep.subr.mxu0 0.0
        %943 = vmatpush1.msra.mxu0 0.0
        %944 = vmatprep.subr.mxu0 0.0
        %945 = vmatpush1.msra.mxu0 0.0
        %946 = vmatprep.subr.mxu0 0.0
        %947 = vmatpush1.msra.mxu0 0.0
        %948 = vmatprep.subr.mxu0 0.0
        %949 = vmatpush1.msra.mxu0 0.0
        %950 = vmatprep.subr.mxu0 0.0
        %951 = vmatpush1.msra.mxu0 0.0
        %952 = vmatprep.subr.mxu0 0.0
        %953 = vmatpush1.msra.mxu0 0.0
        %954 = vmatprep.subr.mxu0 0.0
        %955 = vmatpush1.msra.mxu0 0.0
        %956 = vmatprep.subr.mxu0 0.0
        %957 = vmatpush1.msra.mxu0 0.0
        %958 = vmatprep.subr.mxu0 0.0
        %959 = vmatpush1.msra.mxu0 0.0
        %960 = vmatprep.subr.mxu0 0.0
        %961 = vmatpush1.msra.mxu0 0.0
        %962 = vmatprep.subr.mxu0 0.0
        %963 = vmatpush1.msra.mxu0 0.0
        %964 = vmatprep.subr.mxu0 0.0
        %965 = vmatpush1.msra.mxu0 0.0
        %966 = vmatprep.subr.mxu0 0.0
        %967 = vmatpush1.msra.mxu0 0.0
        %968 = vmatprep.subr.mxu0 0.0
        %969 = vmatpush1.msra.mxu0 0.0
        %970 = vmatprep.subr.mxu0 0.0
        %971 = vmatpush1.msra.mxu0 0.0
        %972 = vmatprep.subr.mxu0 0.0
        %973 = vmatpush1.msra.mxu0 0.0
        %974 = vmatprep.subr.mxu0 0.0
        %975 = vmatpush1.msra.mxu0 0.0
        %976 = vmatprep.subr.mxu0 0.0
        %977 = vmatpush1.msra.mxu0 0.0
        %978 = vmatprep.subr.mxu0 0.0
        %979 = vmatpush1.msra.mxu0 0.0
        %980 = vmatprep.subr.mxu0 0.0
        %981 = vmatpush1.msra.mxu0 0.0
        %982 = vmatprep.subr.mxu0 0.0
        %983 = vmatpush1.msra.mxu0 0.0
        %984 = vmatprep.subr.mxu0 0.0
        %985 = vmatpush1.msra.mxu0 0.0
        %986 = vmatprep.subr.mxu0 0.0
        %987 = vmatpush1.msra.mxu0 0.0
        %988 = vmatprep.subr.mxu0 0.0
        %989 = vmatpush1.msra.mxu0 0.0
        %990 = vmatprep.subr.mxu0 0.0
        %991 = vmatpush1.msra.mxu0 0.0
        %992 = vmatprep.subr.mxu0 0.0
        %993 = vmatpush1.msra.mxu0 0.0
        %994 = vmatprep.subr.mxu0 0.0
        %995 = vmatpush1.msra.mxu0 0.0
        %996 = vmatprep.subr.mxu0 0.0
        %997 = vmatpush1.msra.mxu0 0.0
        %998 = vmatprep.subr.mxu0 0.0
        %999 = vmatpush1.msra.mxu0 0.0
        %1000 = vmatprep.mubr.f32.mxu0 0.0
        %1001 = vmatmul.mubr.f32.gmra.mrb[0].mxu0 %v931
        %v1002 = vpop.f32.mrb[0].mxu0
        %v1003 = vadd.f32 %v922, %v1002
        %v1004 = vpop.f32.mrb[0].mxu0
        %1005 = vmatprep.mubr.f32.mxu0 0.0
        %1006 = vmatmul.mubr.f32.gmra.mrb[0].mxu0 %v934
        %v1007 = vpop.f32.mrb[0].mxu0
        %v1008 = vadd.f32 %v927, %v1007
        %v1009 = vpop.f32.mrb[0].mxu0
        %1010 = vdwg.mxu0
        %v1012 = vsel %vm215, %v847, 0
        %v1015 = vsel %vm215, %v848, 0
        %1017 = vmatprep.subr.mxu0 0.0
        %1018 = vmatpush1.msra.mxu0 %v180
        %1019 = vmatprep.subr.mxu0 0.0
        %1020 = vmatpush1.msra.mxu0 %v181
        %1021 = vmatprep.subr.mxu0 0.0
        %1022 = vmatpush1.msra.mxu0 %v224
        %1023 = vmatprep.subr.mxu0 0.0
        %1024 = vmatpush1.msra.mxu0 0.0
        %1025 = vmatprep.subr.mxu0 0.0
        %1026 = vmatpush1.msra.mxu0 0.0
        %1027 = vmatprep.subr.mxu0 0.0
        %1028 = vmatpush1.msra.mxu0 0.0
        %1029 = vmatprep.subr.mxu0 0.0
        %1030 = vmatpush1.msra.mxu0 0.0
        %1031 = vmatprep.subr.mxu0 0.0
        %1032 = vmatpush1.msra.mxu0 0.0
        %1033 = vmatprep.subr.mxu0 0.0
        %1034 = vmatpush1.msra.mxu0 0.0
        %1035 = vmatprep.subr.mxu0 0.0
        %1036 = vmatpush1.msra.mxu0 0.0
        %1037 = vmatprep.subr.mxu0 0.0
        %1038 = vmatpush1.msra.mxu0 0.0
        %1039 = vmatprep.subr.mxu0 0.0
        %1040 = vmatpush1.msra.mxu0 0.0
        %1041 = vmatprep.subr.mxu0 0.0
        %1042 = vmatpush1.msra.mxu0 0.0
        %1043 = vmatprep.subr.mxu0 0.0
        %1044 = vmatpush1.msra.mxu0 0.0
        %1045 = vmatprep.subr.mxu0 0.0
        %1046 = vmatpush1.msra.mxu0 0.0
        %1047 = vmatprep.subr.mxu0 0.0
        %1048 = vmatpush1.msra.mxu0 0.0
        %1049 = vmatprep.subr.mxu0 0.0
        %1050 = vmatpush1.msra.mxu0 0.0
        %1051 = vmatprep.subr.mxu0 0.0
        %1052 = vmatpush1.msra.mxu0 0.0
        %1053 = vmatprep.subr.mxu0 0.0
        %1054 = vmatpush1.msra.mxu0 0.0
        %1055 = vmatprep.subr.mxu0 0.0
        %1056 = vmatpush1.msra.mxu0 0.0
        %1057 = vmatprep.subr.mxu0 0.0
        %1058 = vmatpush1.msra.mxu0 0.0
        %1059 = vmatprep.subr.mxu0 0.0
        %1060 = vmatpush1.msra.mxu0 0.0
        %1061 = vmatprep.subr.mxu0 0.0
        %1062 = vmatpush1.msra.mxu0 0.0
        %1063 = vmatprep.subr.mxu0 0.0
        %1064 = vmatpush1.msra.mxu0 0.0
        %1065 = vmatprep.subr.mxu0 0.0
        %1066 = vmatpush1.msra.mxu0 0.0
        %1067 = vmatprep.subr.mxu0 0.0
        %1068 = vmatpush1.msra.mxu0 0.0
        %1069 = vmatprep.subr.mxu0 0.0
        %1070 = vmatpush1.msra.mxu0 0.0
        %1071 = vmatprep.subr.mxu0 0.0
        %1072 = vmatpush1.msra.mxu0 0.0
        %1073 = vmatprep.subr.mxu0 0.0
        %1074 = vmatpush1.msra.mxu0 0.0
        %1075 = vmatprep.subr.mxu0 0.0
        %1076 = vmatpush1.msra.mxu0 0.0
        %1077 = vmatprep.subr.mxu0 0.0
        %1078 = vmatpush1.msra.mxu0 0.0
        %1079 = vmatprep.subr.mxu0 0.0
        %1080 = vmatpush1.msra.mxu0 0.0
        %1081 = vmatprep.mubr.f32.mxu0 0.0
        %1082 = vmatmul.mubr.f32.gmra.mrb[0].mxu0 %v1012
        %v1083 = vpop.f32.mrb[0].mxu0
        %v1084 = vadd.f32 0.0, %v1083
        %v1085 = vpop.f32.mrb[0].mxu0
        %1086 = vmatprep.mubr.f32.mxu0 0.0
        %1087 = vmatmul.mubr.f32.gmra.mrb[0].mxu0 %v1015
        %v1088 = vpop.f32.mrb[0].mxu0
        %v1089 = vadd.f32 0.0, %v1088
        %v1090 = vpop.f32.mrb[0].mxu0
        %1091 = vdwg.mxu0
        %v1092 = vadd.f32 %v1003, %v1084
        %v1093 = vadd.f32 %v1008, %v1089
        %v1096 = vrot.slane %v1092, 7
        %v1097 = vrot.slane %v1093, 7
        %v1098 = vsel %vm467, %v1096, %v1097
        %v1101 = vsel %vm467, %v1092, %v1096
        %v1102 = vrot.slane %v1092, 1
        %v1103 = vrot.slane %v1093, 1
        %v1104 = vsel %vm474, %v1102, %v1103
        %v1107 = vsel %vm474, %v1103, %v1093
        %v1108 = vmul.f32 %v1101, 0.25
        %v1109 = vmul.f32 %v1098, 0.25
        %v1110 = vmul.f32 %v1092, 0.75
        %v1111 = vmul.f32 %v1093, 0.75
        %v1112 = vadd.f32 %v1108, %v1110
        %v1113 = vadd.f32 %v1109, %v1111
        %v1114 = vmul.f32 %v1104, 0.25
        %v1115 = vmul.f32 %v1107, 0.25
        %v1116 = vadd.f32 %v1110, %v1114
        %v1117 = vadd.f32 %v1111, %v1115
        %s1118 = scalar_lea.vmem %s177, 32 [#allocation7]
        %1119 = vst.msk [vmem:[%s1118] sm:$0xff] %vm491, %v1112
        %1120 = vst.msk [vmem:[%s1118 + $0x8] sm:$0xff] %vm491, %v1113
        %1123 = vrot.lane.b32.xlu0 %v1116, 32
        %v1124 = vpop.permute.xlu0 %1123
        %1125 = vrot.lane.b32.xlu0 %v1117, 32
        %v1126 = vpop.permute.xlu0 %1125
        %1129 = vst.msk [vmem:[%s1118] sm:$0xff] %vm502, %v1124
        %1130 = vst.msk [vmem:[%s1118 + $0x8] sm:$0xff] %vm502, %v1126
        %s1131 = scalar_lea.vmem %s153, 48 [#allocation2]
        %v1132 = vld [vmem:[%s1131] sm:$0xff]
        %v1133 = vld [vmem:[%s1131 + $0x8] sm:$0xff]
        %1136 = vrot.lane.b32.xlu0 %v1132, 1
        %v1137 = vpop.permute.xlu0 %1136
        %1138 = vrot.lane.b32.xlu0 %v1133, 1
        %v1139 = vpop.permute.xlu0 %1138
        %1142 = vrot.lane.b32.xlu0 %v1132, 2
        %v1143 = vpop.permute.xlu0 %1142
        %1144 = vrot.lane.b32.xlu0 %v1133, 2
        %v1145 = vpop.permute.xlu0 %1144
        %v1148 = vsel %vm199, %v1132, %v1137
        %v1149 = vsel %vm199, %v1133, %v1139
        %v1150 = vsel %vm202, %v1148, %v1143
        %v1151 = vsel %vm202, %v1149, %v1145
        %v1152 = vpack.c.bf16 %v1151, %v1150
        %v1153 = vunpack.c.l.bf16 %v1152
        %v1154 = vunpack.c.h.bf16 %v1152
        %v1155 = vsub.f32 %v1150, %v1153
        %v1156 = vsub.f32 %v1151, %v1154
        %v1157 = vpack.c.bf16 %v1156, %v1155
        %v1158 = vunpack.c.l.bf16 %v1157
        %v1159 = vunpack.c.h.bf16 %v1157
        %v1160 = vsub.f32 %v1155, %v1158
        %v1161 = vsub.f32 %v1156, %v1159
        %v1163 = vsel %vm215, %v1158, 0
        %v1166 = vsel %vm215, %v1159, 0
        %1168 = vmatprep.subr.mxu0 0.0
        %1169 = vmatpush1.msra.mxu0 %v180
        %1170 = vmatprep.subr.mxu0 0.0
        %1171 = vmatpush1.msra.mxu0 %v181
        %1172 = vmatprep.subr.mxu0 0.0
        %1173 = vmatpush1.msra.mxu0 %v224
        %1174 = vmatprep.subr.mxu0 0.0
        %1175 = vmatpush1.msra.mxu0 0.0
        %1176 = vmatprep.subr.mxu0 0.0
        %1177 = vmatpush1.msra.mxu0 0.0
        %1178 = vmatprep.subr.mxu0 0.0
        %1179 = vmatpush1.msra.mxu0 0.0
        %1180 = vmatprep.subr.mxu0 0.0
        %1181 = vmatpush1.msra.mxu0 0.0
        %1182 = vmatprep.subr.mxu0 0.0
        %1183 = vmatpush1.msra.mxu0 0.0
        %1184 = vmatprep.subr.mxu0 0.0
        %1185 = vmatpush1.msra.mxu0 0.0
        %1186 = vmatprep.subr.mxu0 0.0
        %1187 = vmatpush1.msra.mxu0 0.0
        %1188 = vmatprep.subr.mxu0 0.0
        %1189 = vmatpush1.msra.mxu0 0.0
        %1190 = vmatprep.subr.mxu0 0.0
        %1191 = vmatpush1.msra.mxu0 0.0
        %1192 = vmatprep.subr.mxu0 0.0
        %1193 = vmatpush1.msra.mxu0 0.0
        %1194 = vmatprep.subr.mxu0 0.0
        %1195 = vmatpush1.msra.mxu0 0.0
        %1196 = vmatprep.subr.mxu0 0.0
        %1197 = vmatpush1.msra.mxu0 0.0
        %1198 = vmatprep.subr.mxu0 0.0
        %1199 = vmatpush1.msra.mxu0 0.0
        %1200 = vmatprep.subr.mxu0 0.0
        %1201 = vmatpush1.msra.mxu0 0.0
        %1202 = vmatprep.subr.mxu0 0.0
        %1203 = vmatpush1.msra.mxu0 0.0
        %1204 = vmatprep.subr.mxu0 0.0
        %1205 = vmatpush1.msra.mxu0 0.0
        %1206 = vmatprep.subr.mxu0 0.0
        %1207 = vmatpush1.msra.mxu0 0.0
        %1208 = vmatprep.subr.mxu0 0.0
        %1209 = vmatpush1.msra.mxu0 0.0
        %1210 = vmatprep.subr.mxu0 0.0
        %1211 = vmatpush1.msra.mxu0 0.0
        %1212 = vmatprep.subr.mxu0 0.0
        %1213 = vmatpush1.msra.mxu0 0.0
        %1214 = vmatprep.subr.mxu0 0.0
        %1215 = vmatpush1.msra.mxu0 0.0
        %1216 = vmatprep.subr.mxu0 0.0
        %1217 = vmatpush1.msra.mxu0 0.0
        %1218 = vmatprep.subr.mxu0 0.0
        %1219 = vmatpush1.msra.mxu0 0.0
        %1220 = vmatprep.subr.mxu0 0.0
        %1221 = vmatpush1.msra.mxu0 0.0
        %1222 = vmatprep.subr.mxu0 0.0
        %1223 = vmatpush1.msra.mxu0 0.0
        %1224 = vmatprep.subr.mxu0 0.0
        %1225 = vmatpush1.msra.mxu0 0.0
        %1226 = vmatprep.subr.mxu0 0.0
        %1227 = vmatpush1.msra.mxu0 0.0
        %1228 = vmatprep.subr.mxu0 0.0
        %1229 = vmatpush1.msra.mxu0 0.0
        %1230 = vmatprep.subr.mxu0 0.0
        %1231 = vmatpush1.msra.mxu0 0.0
        %1232 = vmatprep.mubr.f32.mxu0 0.0
        %1233 = vmatmul.mubr.f32.gmra.mrb[0].mxu0 %v1163
        %v1234 = vpop.f32.mrb[0].mxu0
        %v1235 = vadd.f32 0.0, %v1234
        %v1236 = vpop.f32.mrb[0].mxu0
        %1237 = vmatprep.mubr.f32.mxu0 0.0
        %1238 = vmatmul.mubr.f32.gmra.mrb[0].mxu0 %v1166
        %v1239 = vpop.f32.mrb[0].mxu0
        %v1240 = vadd.f32 0.0, %v1239
        %v1241 = vpop.f32.mrb[0].mxu0
        %1242 = vdwg.mxu0
        %v1244 = vsel %vm215, %v1153, 0
        %v1247 = vsel %vm215, %v1154, 0
        %1249 = vmatprep.subr.mxu0 0.0
        %1250 = vmatpush1.msra.mxu0 %v180
        %1251 = vmatprep.subr.mxu0 0.0
        %1252 = vmatpush1.msra.mxu0 %v181
        %1253 = vmatprep.subr.mxu0 0.0
        %1254 = vmatpush1.msra.mxu0 %v224
        %1255 = vmatprep.subr.mxu0 0.0
        %1256 = vmatpush1.msra.mxu0 0.0
        %1257 = vmatprep.subr.mxu0 0.0
        %1258 = vmatpush1.msra.mxu0 0.0
        %1259 = vmatprep.subr.mxu0 0.0
        %1260 = vmatpush1.msra.mxu0 0.0
        %1261 = vmatprep.subr.mxu0 0.0
        %1262 = vmatpush1.msra.mxu0 0.0
        %1263 = vmatprep.subr.mxu0 0.0
        %1264 = vmatpush1.msra.mxu0 0.0
        %1265 = vmatprep.subr.mxu0 0.0
        %1266 = vmatpush1.msra.mxu0 0.0
        %1267 = vmatprep.subr.mxu0 0.0
        %1268 = vmatpush1.msra.mxu0 0.0
        %1269 = vmatprep.subr.mxu0 0.0
        %1270 = vmatpush1.msra.mxu0 0.0
        %1271 = vmatprep.subr.mxu0 0.0
        %1272 = vmatpush1.msra.mxu0 0.0
        %1273 = vmatprep.subr.mxu0 0.0
        %1274 = vmatpush1.msra.mxu0 0.0
        %1275 = vmatprep.subr.mxu0 0.0
        %1276 = vmatpush1.msra.mxu0 0.0
        %1277 = vmatprep.subr.mxu0 0.0
        %1278 = vmatpush1.msra.mxu0 0.0
        %1279 = vmatprep.subr.mxu0 0.0
        %1280 = vmatpush1.msra.mxu0 0.0
        %1281 = vmatprep.subr.mxu0 0.0
        %1282 = vmatpush1.msra.mxu0 0.0
        %1283 = vmatprep.subr.mxu0 0.0
        %1284 = vmatpush1.msra.mxu0 0.0
        %1285 = vmatprep.subr.mxu0 0.0
        %1286 = vmatpush1.msra.mxu0 0.0
        %1287 = vmatprep.subr.mxu0 0.0
        %1288 = vmatpush1.msra.mxu0 0.0
        %1289 = vmatprep.subr.mxu0 0.0
        %1290 = vmatpush1.msra.mxu0 0.0
        %1291 = vmatprep.subr.mxu0 0.0
        %1292 = vmatpush1.msra.mxu0 0.0
        %1293 = vmatprep.subr.mxu0 0.0
        %1294 = vmatpush1.msra.mxu0 0.0
        %1295 = vmatprep.subr.mxu0 0.0
        %1296 = vmatpush1.msra.mxu0 0.0
        %1297 = vmatprep.subr.mxu0 0.0
        %1298 = vmatpush1.msra.mxu0 0.0
        %1299 = vmatprep.subr.mxu0 0.0
        %1300 = vmatpush1.msra.mxu0 0.0
        %1301 = vmatprep.subr.mxu0 0.0
        %1302 = vmatpush1.msra.mxu0 0.0
        %1303 = vmatprep.subr.mxu0 0.0
        %1304 = vmatpush1.msra.mxu0 0.0
        %1305 = vmatprep.subr.mxu0 0.0
        %1306 = vmatpush1.msra.mxu0 0.0
        %1307 = vmatprep.subr.mxu0 0.0
        %1308 = vmatpush1.msra.mxu0 0.0
        %1309 = vmatprep.subr.mxu0 0.0
        %1310 = vmatpush1.msra.mxu0 0.0
        %1311 = vmatprep.subr.mxu0 0.0
        %1312 = vmatpush1.msra.mxu0 0.0
        %1313 = vmatprep.mubr.f32.mxu0 0.0
        %1314 = vmatmul.mubr.f32.gmra.mrb[0].mxu0 %v1244
        %v1315 = vpop.f32.mrb[0].mxu0
        %v1316 = vadd.f32 %v1235, %v1315
        %v1317 = vpop.f32.mrb[0].mxu0
        %1318 = vmatprep.mubr.f32.mxu0 0.0
        %1319 = vmatmul.mubr.f32.gmra.mrb[0].mxu0 %v1247
        %v1320 = vpop.f32.mrb[0].mxu0
        %v1321 = vadd.f32 %v1240, %v1320
        %v1322 = vpop.f32.mrb[0].mxu0
        %1323 = vdwg.mxu0
        %v1325 = vsel %vm215, %v1160, 0
        %v1328 = vsel %vm215, %v1161, 0
        %1330 = vmatprep.subr.mxu0 0.0
        %1331 = vmatpush1.msra.mxu0 %v180
        %1332 = vmatprep.subr.mxu0 0.0
        %1333 = vmatpush1.msra.mxu0 %v181
        %1334 = vmatprep.subr.mxu0 0.0
        %1335 = vmatpush1.msra.mxu0 %v224
        %1336 = vmatprep.subr.mxu0 0.0
        %1337 = vmatpush1.msra.mxu0 0.0
        %1338 = vmatprep.subr.mxu0 0.0
        %1339 = vmatpush1.msra.mxu0 0.0
        %1340 = vmatprep.subr.mxu0 0.0
        %1341 = vmatpush1.msra.mxu0 0.0
        %1342 = vmatprep.subr.mxu0 0.0
        %1343 = vmatpush1.msra.mxu0 0.0
        %1344 = vmatprep.subr.mxu0 0.0
        %1345 = vmatpush1.msra.mxu0 0.0
        %1346 = vmatprep.subr.mxu0 0.0
        %1347 = vmatpush1.msra.mxu0 0.0
        %1348 = vmatprep.subr.mxu0 0.0
        %1349 = vmatpush1.msra.mxu0 0.0
        %1350 = vmatprep.subr.mxu0 0.0
        %1351 = vmatpush1.msra.mxu0 0.0
        %1352 = vmatprep.subr.mxu0 0.0
        %1353 = vmatpush1.msra.mxu0 0.0
        %1354 = vmatprep.subr.mxu0 0.0
        %1355 = vmatpush1.msra.mxu0 0.0
        %1356 = vmatprep.subr.mxu0 0.0
        %1357 = vmatpush1.msra.mxu0 0.0
        %1358 = vmatprep.subr.mxu0 0.0
        %1359 = vmatpush1.msra.mxu0 0.0
        %1360 = vmatprep.subr.mxu0 0.0
        %1361 = vmatpush1.msra.mxu0 0.0
        %1362 = vmatprep.subr.mxu0 0.0
        %1363 = vmatpush1.msra.mxu0 0.0
        %1364 = vmatprep.subr.mxu0 0.0
        %1365 = vmatpush1.msra.mxu0 0.0
        %1366 = vmatprep.subr.mxu0 0.0
        %1367 = vmatpush1.msra.mxu0 0.0
        %1368 = vmatprep.subr.mxu0 0.0
        %1369 = vmatpush1.msra.mxu0 0.0
        %1370 = vmatprep.subr.mxu0 0.0
        %1371 = vmatpush1.msra.mxu0 0.0
        %1372 = vmatprep.subr.mxu0 0.0
        %1373 = vmatpush1.msra.mxu0 0.0
        %1374 = vmatprep.subr.mxu0 0.0
        %1375 = vmatpush1.msra.mxu0 0.0
        %1376 = vmatprep.subr.mxu0 0.0
        %1377 = vmatpush1.msra.mxu0 0.0
        %1378 = vmatprep.subr.mxu0 0.0
        %1379 = vmatpush1.msra.mxu0 0.0
        %1380 = vmatprep.subr.mxu0 0.0
        %1381 = vmatpush1.msra.mxu0 0.0
        %1382 = vmatprep.subr.mxu0 0.0
        %1383 = vmatpush1.msra.mxu0 0.0
        %1384 = vmatprep.subr.mxu0 0.0
        %1385 = vmatpush1.msra.mxu0 0.0
        %1386 = vmatprep.subr.mxu0 0.0
        %1387 = vmatpush1.msra.mxu0 0.0
        %1388 = vmatprep.subr.mxu0 0.0
        %1389 = vmatpush1.msra.mxu0 0.0
        %1390 = vmatprep.subr.mxu0 0.0
        %1391 = vmatpush1.msra.mxu0 0.0
        %1392 = vmatprep.subr.mxu0 0.0
        %1393 = vmatpush1.msra.mxu0 0.0
        %1394 = vmatprep.mubr.f32.mxu0 0.0
        %1395 = vmatmul.mubr.f32.gmra.mrb[0].mxu0 %v1325
        %v1396 = vpop.f32.mrb[0].mxu0
        %v1397 = vadd.f32 0.0, %v1396
        %v1398 = vpop.f32.mrb[0].mxu0
        %1399 = vmatprep.mubr.f32.mxu0 0.0
        %1400 = vmatmul.mubr.f32.gmra.mrb[0].mxu0 %v1328
        %v1401 = vpop.f32.mrb[0].mxu0
        %v1402 = vadd.f32 0.0, %v1401
        %v1403 = vpop.f32.mrb[0].mxu0
        %1404 = vdwg.mxu0
        %v1405 = vadd.f32 %v1316, %v1397
        %v1406 = vadd.f32 %v1321, %v1402
        %v1409 = vrot.slane %v1405, 7
        %v1410 = vrot.slane %v1406, 7
        %v1411 = vsel %vm467, %v1409, %v1410
        %v1414 = vsel %vm467, %v1405, %v1409
        %v1415 = vrot.slane %v1405, 1
        %v1416 = vrot.slane %v1406, 1
        %v1417 = vsel %vm474, %v1415, %v1416
        %v1420 = vsel %vm474, %v1416, %v1406
        %v1421 = vmul.f32 %v1414, 0.25
        %v1422 = vmul.f32 %v1411, 0.25
        %v1423 = vmul.f32 %v1405, 0.75
        %v1424 = vmul.f32 %v1406, 0.75
        %v1425 = vadd.f32 %v1421, %v1423
        %v1426 = vadd.f32 %v1422, %v1424
        %v1427 = vmul.f32 %v1417, 0.25
        %v1428 = vmul.f32 %v1420, 0.25
        %v1429 = vadd.f32 %v1423, %v1427
        %v1430 = vadd.f32 %v1424, %v1428
        %s1431 = scalar_lea.vmem %s177, 48 [#allocation7]
        %1432 = vst.msk [vmem:[%s1431] sm:$0xff] %vm491, %v1425
        %1433 = vst.msk [vmem:[%s1431 + $0x8] sm:$0xff] %vm491, %v1426
        %1436 = vrot.lane.b32.xlu0 %v1429, 32
        %v1437 = vpop.permute.xlu0 %1436
        %1438 = vrot.lane.b32.xlu0 %v1430, 32
        %v1439 = vpop.permute.xlu0 %1438
        %1442 = vst.msk [vmem:[%s1431] sm:$0xff] %vm502, %v1437
        %1443 = vst.msk [vmem:[%s1431 + $0x8] sm:$0xff] %vm502, %v1439
        %s1444 = sand.u32 %s75, 1
        %s1445 = scalar_lea.sflag [#allocation4], %s1444
        %s1446 = sand.u32 %s75, 1
        %s1447 = smul.addr %s1446, 64
        %s1448 = scalar_lea.vmem [#allocation7], %s1447
        // Predicated region
        $region37: #{tpu_custom_call.1} parent=27 // pred_check
          %p1449 = pneg %p85
        $region38: #{tpu_custom_call.1} parent=27 // pred_check_branch
          %1451 = sbr.rel (%p1449) target = $region40
        $region39: #{tpu_custom_call.1} parent=27 // pred_region
          %s1452 = smul.u32 4, %s20
          %s1454 = ssub.s32 1024, 1024
          %1455 = vsyncadd %s1445, %s1454
          %s1456 = smul.addr %s1452, 2
          %s1457 = smul.addr %s1456, 128
          %s1458 = scalar_lea.hbm %s2, %s1457
          %s1459 = sshll.u32 %s1448, 4
          %s1460 = int_to_ptr.vmem [resolvable:$true] %s1459
          %1465 = dma.vmem_to_hbm [thread:$0]  %s1460, 1024, %s1458, %s1445, 128, 128, 8
        $region40: #{tpu_custom_call.1} parent=27 // pred_fallthru
          _
      $region28: #{tpu_custom_call.1} parent=5 // pred_fallthru
        _
      %p1466 = scmp.le.s32.totalorder 2, %s15
      // Predicated region
      $region41: #{tpu_custom_call.1} parent=5 // pred_check
        %p1467 = pneg %p1466
      $region42: #{tpu_custom_call.1} parent=5 // pred_check_branch
        %1469 = sbr.rel (%p1467) target = $region44
      $region43: #{tpu_custom_call.1} parent=5 // pred_region
        %s1470 = ssub.s32 %s15, 2
        // Predicated region
        $region45: #{tpu_custom_call.1} parent=43 // pred_check
          %p1471 = pneg %p91
        $region46: #{tpu_custom_call.1} parent=43 // pred_check_branch
          %1473 = sbr.rel (%p1471) target = $region48
        $region47: #{tpu_custom_call.1} parent=43 // pred_region
          %s1474 = sand.u32 %s76, 1
          %s1475 = scalar_lea.sflag [#allocation4], %s1474
          %s1476 = sand.u32 %s76, 1
          %s1477 = smul.addr %s1476, 64
          %s1478 = scalar_lea.vmem [#allocation7], %s1477
          %1479 = dma.done %s1475, 1024
        $region48: #{tpu_custom_call.1} parent=43 // pred_fallthru
          _
      $region44: #{tpu_custom_call.1} parent=5 // pred_fallthru
        _
    $region6: #{tpu_custom_call.1} parent=1 // loop_footer
      %s19 = sadd.s32 1, %s15
    $region7: #{tpu_custom_call.1} parent=1 // loop_footer_branch
      %14 = sbr.rel target = $region3
    $region8: #{tpu_custom_call.1} parent=1 // loop_exit
      _
    %1480 = vsyncpa [#allocation3], 1
    %s1481 = scalar_lea.sflag [#allocation3], 1
    %1482 = vsyncpa %s1481, 1
    %1483 = vsyncpa [#allocation6], 1
    %1484 = vsyncpa [#allocation4], 1
    %s1485 = scalar_lea.sflag [#allocation4], 1
    %1486 = vsyncpa %s1485, 1

</llo_original>
